<compile_context>
chip_gen: v5e
topology: v5e:2x2
jax: 0.10.0
libtpu: 0.0.40
codegen_flags: <defaults>
</compile_context>

<pallas_src>
import jax
import jax.numpy as jnp
from jax.experimental import pallas as pl
from jax.experimental.pallas import tpu as pltpu

# Logical and lane-dense padded feature dims.
D_IN, D_IN_P = 28 * 28, 896      # 784 -> 896  (7 * 128)
D1, D1_P = 512, 512
D2, D2_P = 360, 384
D3, D3_P = 180, 256
D_OUT, D_OUT_P = 10, 128

_PAD_DIMS = [(D_IN_P, D1_P), (D1_P, D2_P), (D2_P, D3_P), (D3_P, D_OUT_P)]


def mlp_kernel(x_ref,
               w1_ref, b1_ref,
               w2_ref, b2_ref,
               w3_ref, b3_ref,
               w4_ref, b4_ref,
               out_ref):
    # Layer 1: 896 -> 512, ReLU.  bf16 operands on the MXU, f32 accumulation;
    # bias-add / ReLU epilogues stay f32 (v5e VPU has no bf16).
    h = jnp.dot(x_ref[...], w1_ref[...], preferred_element_type=jnp.float32)
    h = jnp.maximum(h + b1_ref[...], 0.0)
    # Layer 2: 512 -> 384, ReLU
    h = jnp.dot(h.astype(jnp.bfloat16), w2_ref[...],
                preferred_element_type=jnp.float32)
    h = jnp.maximum(h + b2_ref[...], 0.0)
    # Layer 3: 384 -> 256, ReLU
    h = jnp.dot(h.astype(jnp.bfloat16), w3_ref[...],
                preferred_element_type=jnp.float32)
    h = jnp.maximum(h + b3_ref[...], 0.0)
    # Layer 4: 256 -> 128 (logits, no activation; real logits are cols [:10])
    logits = jnp.dot(h.astype(jnp.bfloat16), w4_ref[...],
                     preferred_element_type=jnp.float32)
    out_ref[...] = (logits + b4_ref[...]).astype(out_ref.dtype)


def _round_up(x, m):
    return (x + m - 1) // m * m


def _pad2(a, rows, cols):
    return jnp.pad(a, ((0, rows - a.shape[0]), (0, cols - a.shape[1])))


def _resident_spec(arr):
    """Full-array block with a constant index_map -> stays VMEM-resident.

    Single-buffered (Buffered(1)): the block never changes across the grid,
    so a second pipeline buffer is pure VMEM waste.  Falls back to the default
    pipelining if pipeline_mode / Buffered is unavailable in the installed JAX.
    """
    idx_map = lambda i: (0, 0)
    try:
        return pl.BlockSpec(arr.shape, idx_map, pipeline_mode=pl.Buffered(1))
    except (AttributeError, TypeError):
        return pl.BlockSpec(arr.shape, idx_map)


def _tile_m(batch):
    """Batch tile: >=2 grid steps when B permits (v7x dual-TC sharding),
    multiple of 16 (bf16 sublane packing), capped at 1024 (VMEM / step-
    overhead sweet spot on v6e/v7x)."""
    half = -(-batch // 2)                       # cdiv(batch, 2)
    return min(1024, _round_up(max(half, 16), 16))


def prepare_params(params):
    """Zero-pad weights/biases to lane-dense dims; weights bf16, biases f32."""
    padded = []
    for (w, b), (rp, cp) in zip(params, _PAD_DIMS):
        wp = _pad2(w.astype(jnp.bfloat16), rp, cp)
        bp = _pad2(b.reshape(1, -1).astype(jnp.float32), 1, cp)
        padded.append((wp, bp))
    return padded


def neural_network32_forward(x, params):
    """x: (B, 1, 28, 28) or (B, 28, 28) float32.  Returns (B, 10) f32 logits."""
    B = x.shape[0]
    x_flat = x.reshape(B, -1)                   # nn.Flatten()
    assert x_flat.shape[1] == D_IN

    tm = _tile_m(B)
    b_pad = _round_up(B, tm)
    grid = (b_pad // tm,)

    # Cast to bf16 *before* padding: the padded HBM staging buffer is bf16
    # only, halving pre-kernel input traffic.
    x_p = _pad2(x_flat.astype(jnp.bfloat16), b_pad, D_IN_P)

    (w1, b1), (w2, b2), (w3, b3), (w4, b4) = prepare_params(params)

    flops = 2 * b_pad * (D_IN_P * D1_P + D1_P * D2_P + D2_P * D3_P
                         + D3_P * D_OUT_P)
    bytes_accessed = (x_p.size * 2 + b_pad * D_OUT_P * 4
                      + sum(w.size * 2 + b.size * 4
                            for w, b in [(w1, b1), (w2, b2), (w3, b3), (w4, b4)]))

    out_p = pl.pallas_call(
        mlp_kernel,
        out_shape=jax.ShapeDtypeStruct((b_pad, D_OUT_P), jnp.float32),
        grid=grid,
        in_specs=[
            pl.BlockSpec((tm, D_IN_P), lambda i: (i, 0)),
            _resident_spec(w1), _resident_spec(b1),
            _resident_spec(w2), _resident_spec(b2),
            _resident_spec(w3), _resident_spec(b3),
            _resident_spec(w4), _resident_spec(b4),
        ],
        out_specs=pl.BlockSpec((tm, D_OUT_P), lambda i: (i, 0)),
        compiler_params=pltpu.CompilerParams(
            dimension_semantics=("parallel",),
            vmem_limit_bytes=32 * 1024 * 1024),
        cost_estimate=pl.CostEstimate(flops=flops, transcendentals=0,
                                      bytes_accessed=bytes_accessed),
    )(x_p, w1, b1, w2, b2, w3, b3, w4, b4)

    return out_p[:B, :D_OUT]


def init_params(key):
    """Deterministic init.  Weights are (in, out); biases are (1, out), f32."""
    dims = [(D_IN, D1), (D1, D2), (D2, D3), (D3, D_OUT)]
    params = []
    for i, (fan_in, fan_out) in enumerate(dims):
        kw, kb, key = jax.random.split(jax.random.fold_in(key, i), 3)
        bound = 1.0 / jnp.sqrt(fan_in)  # PyTorch Linear default range
        w = jax.random.uniform(kw, (fan_in, fan_out), jnp.float32, -bound, bound)
        b = jax.random.uniform(kb, (1, fan_out), jnp.float32, -bound, bound)
        params.append((w, b))
    return params


def reference_forward(x, params):
    """Pure-JAX reference mirroring the kernel's bf16-operand / f32-accum path."""
    h = x.reshape(x.shape[0], -1).astype(jnp.bfloat16).astype(jnp.float32)
    n = len(params)
    for i, (w, b) in enumerate(params):
        w16 = w.astype(jnp.bfloat16).astype(jnp.float32)
        h = jnp.dot(h, w16, preferred_element_type=jnp.float32) + b.reshape(1, -1)
        if i < n - 1:
            h = jnp.maximum(h, 0.0)
            h = h.astype(jnp.bfloat16).astype(jnp.float32)
    return h


if __name__ == "__main__":
    key = jax.random.PRNGKey(0)
    k_params, k_x = jax.random.split(key)

    params = init_params(k_params)
    # MNIST-like small batch, NCHW: (B=2, C=1, H=28, W=28)
    x = jax.random.normal(k_x, (2, 1, 28, 28), dtype=jnp.float32)

    logits = neural_network32_forward(x, params)
    logits = jax.block_until_ready(logits)

    ref = reference_forward(x, params)
    assert logits.shape == (2, 10)
    assert jnp.allclose(logits, ref, atol=1e-2, rtol=1e-2), (
        f"max abs err {jnp.max(jnp.abs(logits - ref))}")

    print("KERNEL_OK")
</pallas_src>

<mosaic_0001>
module attributes {stable_mosaic.version = 11 : i64} {
  func.func @mlp_kernel(%arg0: i32, %arg1: memref<16x896xbf16, #tpu.memory_space<vmem>>, %arg2: memref<896x512xbf16, #tpu.memory_space<vmem>>, %arg3: memref<1x512xf32, #tpu.memory_space<vmem>>, %arg4: memref<512x384xbf16, #tpu.memory_space<vmem>>, %arg5: memref<1x384xf32, #tpu.memory_space<vmem>>, %arg6: memref<384x256xbf16, #tpu.memory_space<vmem>>, %arg7: memref<1x256xf32, #tpu.memory_space<vmem>>, %arg8: memref<256x128xbf16, #tpu.memory_space<vmem>>, %arg9: memref<1x128xf32, #tpu.memory_space<vmem>>, %arg10: memref<16x128xf32, #tpu.memory_space<vmem>>) attributes {dimension_semantics = [#tpu.dimension_semantics<parallel>], iteration_bounds = array<i64: 1>, scalar_prefetch = 0 : i64, scratch_operands = 0 : i64, tpu.core_type = #tpu.core_type<tc>, window_params = [{transform_indices = @transform_0, window_bounds = array<i64: 16, 896>}, {pipeline_mode = #tpu.pipeline_mode<synchronous>, transform_indices = @transform_1, window_bounds = array<i64: 896, 512>}, {pipeline_mode = #tpu.pipeline_mode<synchronous>, transform_indices = @transform_2, window_bounds = array<i64: 1, 512>}, {pipeline_mode = #tpu.pipeline_mode<synchronous>, transform_indices = @transform_3, window_bounds = array<i64: 512, 384>}, {pipeline_mode = #tpu.pipeline_mode<synchronous>, transform_indices = @transform_4, window_bounds = array<i64: 1, 384>}, {pipeline_mode = #tpu.pipeline_mode<synchronous>, transform_indices = @transform_5, window_bounds = array<i64: 384, 256>}, {pipeline_mode = #tpu.pipeline_mode<synchronous>, transform_indices = @transform_6, window_bounds = array<i64: 1, 256>}, {pipeline_mode = #tpu.pipeline_mode<synchronous>, transform_indices = @transform_7, window_bounds = array<i64: 256, 128>}, {pipeline_mode = #tpu.pipeline_mode<synchronous>, transform_indices = @transform_8, window_bounds = array<i64: 1, 128>}, {transform_indices = @transform_9, window_bounds = array<i64: 16, 128>}]} {
    %c0 = arith.constant 0 : index
    %c0_0 = arith.constant 0 : index
    %0 = vector.load %arg1[%c0, %c0_0] : memref<16x896xbf16, #tpu.memory_space<vmem>>, vector<16x896xbf16>
    %c0_1 = arith.constant 0 : index
    %c0_2 = arith.constant 0 : index
    %1 = vector.load %arg2[%c0_1, %c0_2] : memref<896x512xbf16, #tpu.memory_space<vmem>>, vector<896x512xbf16>
    %cst = arith.constant dense<0.000000e+00> : vector<16x512xf32>
    %2 = tpu.matmul %0, %1, %cst {dimension_numbers = #tpu.dot_dimension_numbers<[1], [0], [0], [1], [0, 0, 1, 1], [], []>} : vector<16x896xbf16>, vector<896x512xbf16>, vector<16x512xf32> -> vector<16x512xf32>
    %c0_3 = arith.constant 0 : index
    %c0_4 = arith.constant 0 : index
    %3 = vector.load %arg3[%c0_3, %c0_4] : memref<1x512xf32, #tpu.memory_space<vmem>>, vector<1x512xf32>
    %4 = vector.broadcast %3 : vector<1x512xf32> to vector<16x512xf32>
    %5 = arith.addf %2, %4 : vector<16x512xf32>
    %cst_5 = arith.constant 0.000000e+00 : f32
    %6 = vector.broadcast %cst_5 : f32 to vector<16x512xf32>
    %7 = arith.maximumf %5, %6 : vector<16x512xf32>
    %8 = arith.truncf %7 : vector<16x512xf32> to vector<16x512xbf16>
    %c0_6 = arith.constant 0 : index
    %c0_7 = arith.constant 0 : index
    %9 = vector.load %arg4[%c0_6, %c0_7] : memref<512x384xbf16, #tpu.memory_space<vmem>>, vector<512x384xbf16>
    %cst_8 = arith.constant dense<0.000000e+00> : vector<16x384xf32>
    %10 = tpu.matmul %8, %9, %cst_8 {dimension_numbers = #tpu.dot_dimension_numbers<[1], [0], [0], [1], [0, 0, 1, 1], [], []>} : vector<16x512xbf16>, vector<512x384xbf16>, vector<16x384xf32> -> vector<16x384xf32>
    %c0_9 = arith.constant 0 : index
    %c0_10 = arith.constant 0 : index
    %11 = vector.load %arg5[%c0_9, %c0_10] : memref<1x384xf32, #tpu.memory_space<vmem>>, vector<1x384xf32>
    %12 = vector.broadcast %11 : vector<1x384xf32> to vector<16x384xf32>
    %13 = arith.addf %10, %12 : vector<16x384xf32>
    %cst_11 = arith.constant 0.000000e+00 : f32
    %14 = vector.broadcast %cst_11 : f32 to vector<16x384xf32>
    %15 = arith.maximumf %13, %14 : vector<16x384xf32>
    %16 = arith.truncf %15 : vector<16x384xf32> to vector<16x384xbf16>
    %c0_12 = arith.constant 0 : index
    %c0_13 = arith.constant 0 : index
    %17 = vector.load %arg6[%c0_12, %c0_13] : memref<384x256xbf16, #tpu.memory_space<vmem>>, vector<384x256xbf16>
    %cst_14 = arith.constant dense<0.000000e+00> : vector<16x256xf32>
    %18 = tpu.matmul %16, %17, %cst_14 {dimension_numbers = #tpu.dot_dimension_numbers<[1], [0], [0], [1], [0, 0, 1, 1], [], []>} : vector<16x384xbf16>, vector<384x256xbf16>, vector<16x256xf32> -> vector<16x256xf32>
    %c0_15 = arith.constant 0 : index
    %c0_16 = arith.constant 0 : index
    %19 = vector.load %arg7[%c0_15, %c0_16] : memref<1x256xf32, #tpu.memory_space<vmem>>, vector<1x256xf32>
    %20 = vector.broadcast %19 : vector<1x256xf32> to vector<16x256xf32>
    %21 = arith.addf %18, %20 : vector<16x256xf32>
    %cst_17 = arith.constant 0.000000e+00 : f32
    %22 = vector.broadcast %cst_17 : f32 to vector<16x256xf32>
    %23 = arith.maximumf %21, %22 : vector<16x256xf32>
    %24 = arith.truncf %23 : vector<16x256xf32> to vector<16x256xbf16>
    %c0_18 = arith.constant 0 : index
    %c0_19 = arith.constant 0 : index
    %25 = vector.load %arg8[%c0_18, %c0_19] : memref<256x128xbf16, #tpu.memory_space<vmem>>, vector<256x128xbf16>
    %cst_20 = arith.constant dense<0.000000e+00> : vector<16x128xf32>
    %26 = tpu.matmul %24, %25, %cst_20 {dimension_numbers = #tpu.dot_dimension_numbers<[1], [0], [0], [1], [0, 0, 1, 1], [], []>} : vector<16x256xbf16>, vector<256x128xbf16>, vector<16x128xf32> -> vector<16x128xf32>
    %c0_21 = arith.constant 0 : index
    %c0_22 = arith.constant 0 : index
    %27 = vector.load %arg9[%c0_21, %c0_22] : memref<1x128xf32, #tpu.memory_space<vmem>>, vector<1x128xf32>
    %28 = vector.broadcast %27 : vector<1x128xf32> to vector<16x128xf32>
    %29 = arith.addf %26, %28 : vector<16x128xf32>
    %c0_23 = arith.constant 0 : index
    %c0_24 = arith.constant 0 : index
    %30 = vector.load %arg10[%c0_23, %c0_24] : memref<16x128xf32, #tpu.memory_space<vmem>>, vector<16x128xf32>
    tpu.vector_store %arg10[%c0_23, %c0_24], %29 {strides = array<i32>} : memref<16x128xf32, #tpu.memory_space<vmem>>, vector<16x128xf32>,
    return
  }
  func.func @transform_0(%arg0: i32) -> (i32, i32) {
    %c0_i32 = arith.constant 0 : i32
    %c0_i32_0 = arith.constant 0 : i32
    return %arg0, %c0_i32 : i32, i32
  }
  func.func @transform_1(%arg0: i32) -> (i32, i32) {
    %c0_i32 = arith.constant 0 : i32
    %c0_i32_0 = arith.constant 0 : i32
    %c0_i32_1 = arith.constant 0 : i32
    return %c0_i32, %c0_i32_0 : i32, i32
  }
  func.func @transform_2(%arg0: i32) -> (i32, i32) {
    %c0_i32 = arith.constant 0 : i32
    %c0_i32_0 = arith.constant 0 : i32
    %c0_i32_1 = arith.constant 0 : i32
    return %c0_i32, %c0_i32_0 : i32, i32
  }
  func.func @transform_3(%arg0: i32) -> (i32, i32) {
    %c0_i32 = arith.constant 0 : i32
    %c0_i32_0 = arith.constant 0 : i32
    %c0_i32_1 = arith.constant 0 : i32
    return %c0_i32, %c0_i32_0 : i32, i32
  }
  func.func @transform_4(%arg0: i32) -> (i32, i32) {
    %c0_i32 = arith.constant 0 : i32
    %c0_i32_0 = arith.constant 0 : i32
    %c0_i32_1 = arith.constant 0 : i32
    return %c0_i32, %c0_i32_0 : i32, i32
  }
  func.func @transform_5(%arg0: i32) -> (i32, i32) {
    %c0_i32 = arith.constant 0 : i32
    %c0_i32_0 = arith.constant 0 : i32
    %c0_i32_1 = arith.constant 0 : i32
    return %c0_i32, %c0_i32_0 : i32, i32
  }
  func.func @transform_6(%arg0: i32) -> (i32, i32) {
    %c0_i32 = arith.constant 0 : i32
    %c0_i32_0 = arith.constant 0 : i32
    %c0_i32_1 = arith.constant 0 : i32
    return %c0_i32, %c0_i32_0 : i32, i32
  }
  func.func @transform_7(%arg0: i32) -> (i32, i32) {
    %c0_i32 = arith.constant 0 : i32
    %c0_i32_0 = arith.constant 0 : i32
    %c0_i32_1 = arith.constant 0 : i32
    return %c0_i32, %c0_i32_0 : i32, i32
  }
  func.func @transform_8(%arg0: i32) -> (i32, i32) {
    %c0_i32 = arith.constant 0 : i32
    %c0_i32_0 = arith.constant 0 : i32
    %c0_i32_1 = arith.constant 0 : i32
    return %c0_i32, %c0_i32_0 : i32, i32
  }
  func.func @transform_9(%arg0: i32) -> (i32, i32) {
    %c0_i32 = arith.constant 0 : i32
    %c0_i32_0 = arith.constant 0 : i32
    return %arg0, %c0_i32 : i32, i32
  }
}

</mosaic_0001>

<llo_original>
// kernel: tpu_custom_call.1
$region0: #{tpu_custom_call.1}
  #allocation0 [shape = 'u32[]', space=smem, size = 0x4, offset = 0x4, fixed_abs, tag = 'smem constant byte address 0x4 - core index']
  #allocation1 [shape = 'u32[72,128]{1,0:T(1,128)}', space=vmem, size = 0x9000, scoped, tag = 'internal scratch']
  %s0 = inlined_call_operand.hbm [shape: bf16[16,896], index: 0, kind: input, shape index: {}]
  %s1 = inlined_call_operand.hbm [shape: bf16[896,512], index: 1, kind: input, shape index: {}]
  %s2 = inlined_call_operand.hbm [shape: f32[1,512], index: 2, kind: input, shape index: {}]
  %s3 = inlined_call_operand.hbm [shape: bf16[512,384], index: 3, kind: input, shape index: {}]
  %s4 = inlined_call_operand.vmem [shape: f32[1,384], index: 4, kind: input, shape index: {}]
  %s5 = inlined_call_operand.hbm [shape: bf16[384,256], index: 5, kind: input, shape index: {}]
  %s6 = inlined_call_operand.vmem [shape: f32[1,256], index: 6, kind: input, shape index: {}]
  %s7 = inlined_call_operand.hbm [shape: bf16[256,128], index: 7, kind: input, shape index: {}]
  %s8 = inlined_call_operand.vmem [shape: f32[1,128], index: 8, kind: input, shape index: {}]
  %s9 = inlined_call_operand.hbm [shape: f32[16,128], index: 9, kind: output, shape index: {}]
  %s10 = sld [smem:[#allocation0]]
  $region70: #{tpu_custom_call.1} parent=0
    _
  %s12 = ssub.s32 1, %s10
  %s13 = scalar_select 0, %s12, %s10
  $region1: #{tpu_custom_call.1} parent=0
    #allocation2 [shape = 'u8[28672]{0}', space=vmem, size = 0x7000, scoped, tag = 'input window, operand 0, single buffered']
    #allocation3 [shape = 's32[1]{0}', space=sflag, size = 0x4, scoped, tag = 'scoped memory for tpu_custom_call.1']
    #allocation4 [shape = 's32[1]{0}', space=sflag, size = 0x4, scoped, tag = 'scoped memory for tpu_custom_call.1']
    #allocation5 [shape = 'u8[917504]{0}', space=vmem, size = 0xe0000, scoped, tag = 'input window, operand 1, single buffered']
    #allocation6 [shape = 's32[1]{0}', space=sflag, size = 0x4, scoped, tag = 'scoped memory for tpu_custom_call.1']
    #allocation7 [shape = 'u8[2048]{0}', space=vmem, size = 0x800, scoped, tag = 'input window, operand 2, single buffered']
    #allocation8 [shape = 'u8[393216]{0}', space=vmem, size = 0x60000, scoped, tag = 'input window, operand 3, single buffered']
    #allocation9 [shape = 's32[1]{0}', space=sflag, size = 0x4, scoped, tag = 'scoped memory for tpu_custom_call.1']
    #allocation10 [shape = 'u8[196608]{0}', space=vmem, size = 0x30000, scoped, tag = 'input window, operand 5, single buffered']
    #allocation11 [shape = 'u8[65536]{0}', space=vmem, size = 0x10000, scoped, tag = 'input window, operand 7, single buffered']
    #allocation12 [shape = 's32[1]{0}', space=sflag, size = 0x4, scoped, tag = 'scoped memory for tpu_custom_call.1']
    #allocation13 [shape = 'u8[8192]{0}', space=vmem, size = 0x2000, scoped, tag = 'output window, operand 0, single buffered']
    %14 = vsyncpa [#allocation3], 0
    %15 = vsyncpa [#allocation6], 0
    %16 = vsyncpa [#allocation9], 0
    %17 = vsyncpa [#allocation12], 0
    %18 = vsyncpa [#allocation4], 0
    // Predicated region
    $region2: #{tpu_custom_call.1} parent=1 // pred_check
      _
    $region3: #{tpu_custom_call.1} parent=1 // pred_check_branch
      %20 = sbr.rel (0) target = $region5
    $region4: #{tpu_custom_call.1} parent=1 // pred_region
      %22 = vsyncadd [#allocation3], 0
      %s23 = sshll.u32 %s0, 4
      %s24 = int_to_ptr.hbm [resolvable:$true] %s23
      %s25 = sshll.u32 [#allocation2], 4
      %s26 = int_to_ptr.vmem [resolvable:$true] %s25
      %31 = dma.hbm_to_vmem [thread:$0]  %s24, 896, %s26, [#allocation3], 448, 448, 28
    $region5: #{tpu_custom_call.1} parent=1 // pred_fallthru
      _
    // Predicated region
    $region6: #{tpu_custom_call.1} parent=1 // pred_check
      _
    $region7: #{tpu_custom_call.1} parent=1 // pred_check_branch
      %33 = sbr.rel (0) target = $region9
    $region8: #{tpu_custom_call.1} parent=1 // pred_region
      %35 = vsyncadd [#allocation6], 0
      %s36 = sshll.u32 %s1, 4
      %s37 = int_to_ptr.hbm [resolvable:$true] %s36
      %s38 = sshll.u32 [#allocation5], 4
      %s39 = int_to_ptr.vmem [resolvable:$true] %s38
      %44 = dma.hbm_to_vmem [thread:$0]  %s37, 28672, %s39, [#allocation6], 256, 256, 16
    $region9: #{tpu_custom_call.1} parent=1 // pred_fallthru
      _
    // Predicated region
    $region10: #{tpu_custom_call.1} parent=1 // pred_check
      _
    $region11: #{tpu_custom_call.1} parent=1 // pred_check_branch
      %46 = sbr.rel (0) target = $region13
    $region12: #{tpu_custom_call.1} parent=1 // pred_region
      %48 = vsyncadd [#allocation6], 0
      %s50 = sshll.u32 %s2, 4
      %s51 = int_to_ptr.hbm [resolvable:$true] %s50
      %s52 = sshll.u32 [#allocation7], 4
      %s53 = int_to_ptr.vmem [resolvable:$true] %s52
      %55 = dma.hbm_to_vmem [thread:$0]  %s51, 64, %s53, [#allocation6]
    $region13: #{tpu_custom_call.1} parent=1 // pred_fallthru
      _
    // Predicated region
    $region14: #{tpu_custom_call.1} parent=1 // pred_check
      _
    $region15: #{tpu_custom_call.1} parent=1 // pred_check_branch
      %57 = sbr.rel (0) target = $region17
    $region16: #{tpu_custom_call.1} parent=1 // pred_region
      %59 = vsyncadd [#allocation9], 0
      %s60 = sshll.u32 %s3, 4
      %s61 = int_to_ptr.hbm [resolvable:$true] %s60
      %s62 = sshll.u32 [#allocation8], 4
      %s63 = int_to_ptr.vmem [resolvable:$true] %s62
      %68 = dma.hbm_to_vmem [thread:$0]  %s61, 12288, %s63, [#allocation9], 192, 192, 12
    $region17: #{tpu_custom_call.1} parent=1 // pred_fallthru
      _
    // Predicated region
    $region18: #{tpu_custom_call.1} parent=1 // pred_check
      _
    $region19: #{tpu_custom_call.1} parent=1 // pred_check_branch
      %70 = sbr.rel (0) target = $region21
    $region20: #{tpu_custom_call.1} parent=1 // pred_region
      _
    $region21: #{tpu_custom_call.1} parent=1 // pred_fallthru
      _
    // Predicated region
    $region22: #{tpu_custom_call.1} parent=1 // pred_check
      _
    $region23: #{tpu_custom_call.1} parent=1 // pred_check_branch
      %72 = sbr.rel (0) target = $region25
    $region24: #{tpu_custom_call.1} parent=1 // pred_region
      %74 = vsyncadd [#allocation9], 0
      %s75 = sshll.u32 %s5, 4
      %s76 = int_to_ptr.hbm [resolvable:$true] %s75
      %s77 = sshll.u32 [#allocation10], 4
      %s78 = int_to_ptr.vmem [resolvable:$true] %s77
      %83 = dma.hbm_to_vmem [thread:$0]  %s76, 6144, %s78, [#allocation9], 128, 128, 8
    $region25: #{tpu_custom_call.1} parent=1 // pred_fallthru
      _
    // Predicated region
    $region26: #{tpu_custom_call.1} parent=1 // pred_check
      _
    $region27: #{tpu_custom_call.1} parent=1 // pred_check_branch
      %85 = sbr.rel (0) target = $region29
    $region28: #{tpu_custom_call.1} parent=1 // pred_region
      _
    $region29: #{tpu_custom_call.1} parent=1 // pred_fallthru
      _
    // Predicated region
    $region30: #{tpu_custom_call.1} parent=1 // pred_check
      _
    $region31: #{tpu_custom_call.1} parent=1 // pred_check_branch
      %87 = sbr.rel (0) target = $region33
    $region32: #{tpu_custom_call.1} parent=1 // pred_region
      %89 = vsyncadd [#allocation12], 0
      %s90 = sshll.u32 %s7, 4
      %s91 = int_to_ptr.hbm [resolvable:$true] %s90
      %s92 = sshll.u32 [#allocation11], 4
      %s93 = int_to_ptr.vmem [resolvable:$true] %s92
      %98 = dma.hbm_to_vmem [thread:$0]  %s91, 2048, %s93, [#allocation12], 64, 64, 4
    $region33: #{tpu_custom_call.1} parent=1 // pred_fallthru
      _
    // Predicated region
    $region34: #{tpu_custom_call.1} parent=1 // pred_check
      _
    $region35: #{tpu_custom_call.1} parent=1 // pred_check_branch
      %100 = sbr.rel (0) target = $region37
    $region36: #{tpu_custom_call.1} parent=1 // pred_region
      _
    $region37: #{tpu_custom_call.1} parent=1 // pred_fallthru
      _
    // Predicated region
    $region38: #{tpu_custom_call.1} parent=1 // pred_check
      _
    $region39: #{tpu_custom_call.1} parent=1 // pred_check_branch
      %102 = sbr.rel (0) target = $region41
    $region40: #{tpu_custom_call.1} parent=1 // pred_region
      %104 = dma.done [#allocation3], 896
    $region41: #{tpu_custom_call.1} parent=1 // pred_fallthru
      _
    // Predicated region
    $region42: #{tpu_custom_call.1} parent=1 // pred_check
      _
    $region43: #{tpu_custom_call.1} parent=1 // pred_check_branch
      %106 = sbr.rel (0) target = $region45
    $region44: #{tpu_custom_call.1} parent=1 // pred_region
      %108 = dma.done [#allocation6], 28672
    $region45: #{tpu_custom_call.1} parent=1 // pred_fallthru
      _
    // Predicated region
    $region46: #{tpu_custom_call.1} parent=1 // pred_check
      _
    $region47: #{tpu_custom_call.1} parent=1 // pred_check_branch
      %110 = sbr.rel (0) target = $region49
    $region48: #{tpu_custom_call.1} parent=1 // pred_region
      %112 = dma.done [#allocation6], 64
    $region49: #{tpu_custom_call.1} parent=1 // pred_fallthru
      _
    // Predicated region
    $region50: #{tpu_custom_call.1} parent=1 // pred_check
      _
    $region51: #{tpu_custom_call.1} parent=1 // pred_check_branch
      %114 = sbr.rel (0) target = $region53
    $region52: #{tpu_custom_call.1} parent=1 // pred_region
      %116 = dma.done [#allocation9], 12288
    $region53: #{tpu_custom_call.1} parent=1 // pred_fallthru
      _
    // Predicated region
    $region54: #{tpu_custom_call.1} parent=1 // pred_check
      _
    $region55: #{tpu_custom_call.1} parent=1 // pred_check_branch
      %118 = sbr.rel (0) target = $region57
    $region56: #{tpu_custom_call.1} parent=1 // pred_region
      %120 = dma.done [#allocation9], 6144
    $region57: #{tpu_custom_call.1} parent=1 // pred_fallthru
      _
    // Predicated region
    $region58: #{tpu_custom_call.1} parent=1 // pred_check
      _
    $region59: #{tpu_custom_call.1} parent=1 // pred_check_branch
      %122 = sbr.rel (0) target = $region61
    $region60: #{tpu_custom_call.1} parent=1 // pred_region
      %124 = dma.done [#allocation12], 2048
    $region61: #{tpu_custom_call.1} parent=1 // pred_fallthru
      _
    %v125 = vld [vmem:[#allocation2] sm:$0xff]
    %v126 = vld [vmem:[#allocation2 + $0x8] sm:$0xff]
    %v127 = vld [vmem:[#allocation2 + $0x10] sm:$0xff]
    %v128 = vld [vmem:[#allocation2 + $0x18] sm:$0xf]
    %v129 = vld [vmem:[#allocation2 + $0x1c] sm:$0xff]
    %v130 = vld [vmem:[#allocation2 + $0x24] sm:$0xff]
    %v131 = vld [vmem:[#allocation2 + $0x2c] sm:$0xff]
    %v132 = vld [vmem:[#allocation2 + $0x34] sm:$0xf]
    %v133 = vld [vmem:[#allocation5] sm:$0xff]
    %v134 = vld [vmem:[#allocation5 + $0x8] sm:$0xff]
    %v135 = vld [vmem:[#allocation5 + $0x10] sm:$0xff]
    %v136 = vld [vmem:[#allocation5 + $0x18] sm:$0xff]
    %v137 = vld [vmem:[#allocation5 + $0x20] sm:$0xff]
    %v138 = vld [vmem:[#allocation5 + $0x28] sm:$0xff]
    %v139 = vld [vmem:[#allocation5 + $0x30] sm:$0xff]
    %v140 = vld [vmem:[#allocation5 + $0x38] sm:$0xff]
    %v141 = vld [vmem:[#allocation5 + $0x40] sm:$0xff]
    %v142 = vld [vmem:[#allocation5 + $0x48] sm:$0xff]
    %v143 = vld [vmem:[#allocation5 + $0x50] sm:$0xff]
    %v144 = vld [vmem:[#allocation5 + $0x58] sm:$0xff]
    %v145 = vld [vmem:[#allocation5 + $0x60] sm:$0xff]
    %v146 = vld [vmem:[#allocation5 + $0x68] sm:$0xff]
    %v147 = vld [vmem:[#allocation5 + $0x70] sm:$0xff]
    %v148 = vld [vmem:[#allocation5 + $0x78] sm:$0xff]
    %v149 = vld [vmem:[#allocation5 + $0x80] sm:$0xff]
    %v150 = vld [vmem:[#allocation5 + $0x88] sm:$0xff]
    %v151 = vld [vmem:[#allocation5 + $0x90] sm:$0xff]
    %v152 = vld [vmem:[#allocation5 + $0x98] sm:$0xff]
    %v153 = vld [vmem:[#allocation5 + $0xa0] sm:$0xff]
    %v154 = vld [vmem:[#allocation5 + $0xa8] sm:$0xff]
    %v155 = vld [vmem:[#allocation5 + $0xb0] sm:$0xff]
    %v156 = vld [vmem:[#allocation5 + $0xb8] sm:$0xff]
    %v157 = vld [vmem:[#allocation5 + $0xc0] sm:$0xff]
    %v158 = vld [vmem:[#allocation5 + $0xc8] sm:$0xff]
    %v159 = vld [vmem:[#allocation5 + $0xd0] sm:$0xff]
    %v160 = vld [vmem:[#allocation5 + $0xd8] sm:$0xff]
    %v161 = vld [vmem:[#allocation5 + $0xe0] sm:$0xff]
    %v162 = vld [vmem:[#allocation5 + $0xe8] sm:$0xff]
    %v163 = vld [vmem:[#allocation5 + $0xf0] sm:$0xff]
    %v164 = vld [vmem:[#allocation5 + $0xf8] sm:$0xff]
    %v165 = vld [vmem:[#allocation5 + $0x100] sm:$0xff]
    %v166 = vld [vmem:[#allocation5 + $0x108] sm:$0xff]
    %v167 = vld [vmem:[#allocation5 + $0x110] sm:$0xff]
    %v168 = vld [vmem:[#allocation5 + $0x118] sm:$0xff]
    %v169 = vld [vmem:[#allocation5 + $0x120] sm:$0xff]
    %v170 = vld [vmem:[#allocation5 + $0x128] sm:$0xff]
    %v171 = vld [vmem:[#allocation5 + $0x130] sm:$0xff]
    %v172 = vld [vmem:[#allocation5 + $0x138] sm:$0xff]
    %v173 = vld [vmem:[#allocation5 + $0x140] sm:$0xff]
    %v174 = vld [vmem:[#allocation5 + $0x148] sm:$0xff]
    %v175 = vld [vmem:[#allocation5 + $0x150] sm:$0xff]
    %v176 = vld [vmem:[#allocation5 + $0x158] sm:$0xff]
    %v177 = vld [vmem:[#allocation5 + $0x160] sm:$0xff]
    %v178 = vld [vmem:[#allocation5 + $0x168] sm:$0xff]
    %v179 = vld [vmem:[#allocation5 + $0x170] sm:$0xff]
    %v180 = vld [vmem:[#allocation5 + $0x178] sm:$0xff]
    %v181 = vld [vmem:[#allocation5 + $0x180] sm:$0xff]
    %v182 = vld [vmem:[#allocation5 + $0x188] sm:$0xff]
    %v183 = vld [vmem:[#allocation5 + $0x190] sm:$0xff]
    %v184 = vld [vmem:[#allocation5 + $0x198] sm:$0xff]
    %v185 = vld [vmem:[#allocation5 + $0x1a0] sm:$0xff]
    %v186 = vld [vmem:[#allocation5 + $0x1a8] sm:$0xff]
    %v187 = vld [vmem:[#allocation5 + $0x1b0] sm:$0xff]
    %v188 = vld [vmem:[#allocation5 + $0x1b8] sm:$0xff]
    %v189 = vld [vmem:[#allocation5 + $0x1c0] sm:$0xff]
    %v190 = vld [vmem:[#allocation5 + $0x1c8] sm:$0xff]
    %v191 = vld [vmem:[#allocation5 + $0x1d0] sm:$0xff]
    %v192 = vld [vmem:[#allocation5 + $0x1d8] sm:$0xff]
    %v193 = vld [vmem:[#allocation5 + $0x1e0] sm:$0xff]
    %v194 = vld [vmem:[#allocation5 + $0x1e8] sm:$0xff]
    %v195 = vld [vmem:[#allocation5 + $0x1f0] sm:$0xff]
    %v196 = vld [vmem:[#allocation5 + $0x1f8] sm:$0xff]
    %v197 = vld [vmem:[#allocation5 + $0x200] sm:$0xff]
    %v198 = vld [vmem:[#allocation5 + $0x208] sm:$0xff]
    %v199 = vld [vmem:[#allocation5 + $0x210] sm:$0xff]
    %v200 = vld [vmem:[#allocation5 + $0x218] sm:$0xff]
    %v201 = vld [vmem:[#allocation5 + $0x220] sm:$0xff]
    %v202 = vld [vmem:[#allocation5 + $0x228] sm:$0xff]
    %v203 = vld [vmem:[#allocation5 + $0x230] sm:$0xff]
    %v204 = vld [vmem:[#allocation5 + $0x238] sm:$0xff]
    %v205 = vld [vmem:[#allocation5 + $0x240] sm:$0xff]
    %v206 = vld [vmem:[#allocation5 + $0x248] sm:$0xff]
    %v207 = vld [vmem:[#allocation5 + $0x250] sm:$0xff]
    %v208 = vld [vmem:[#allocation5 + $0x258] sm:$0xff]
    %v209 = vld [vmem:[#allocation5 + $0x260] sm:$0xff]
    %v210 = vld [vmem:[#allocation5 + $0x268] sm:$0xff]
    %v211 = vld [vmem:[#allocation5 + $0x270] sm:$0xff]
    %v212 = vld [vmem:[#allocation5 + $0x278] sm:$0xff]
    %v213 = vld [vmem:[#allocation5 + $0x280] sm:$0xff]
    %v214 = vld [vmem:[#allocation5 + $0x288] sm:$0xff]
    %v215 = vld [vmem:[#allocation5 + $0x290] sm:$0xff]
    %v216 = vld [vmem:[#allocation5 + $0x298] sm:$0xff]
    %v217 = vld [vmem:[#allocation5 + $0x2a0] sm:$0xff]
    %v218 = vld [vmem:[#allocation5 + $0x2a8] sm:$0xff]
    %v219 = vld [vmem:[#allocation5 + $0x2b0] sm:$0xff]
    %v220 = vld [vmem:[#allocation5 + $0x2b8] sm:$0xff]
    %v221 = vld [vmem:[#allocation5 + $0x2c0] sm:$0xff]
    %v222 = vld [vmem:[#allocation5 + $0x2c8] sm:$0xff]
    %v223 = vld [vmem:[#allocation5 + $0x2d0] sm:$0xff]
    %v224 = vld [vmem:[#allocation5 + $0x2d8] sm:$0xff]
    %v225 = vld [vmem:[#allocation5 + $0x2e0] sm:$0xff]
    %v226 = vld [vmem:[#allocation5 + $0x2e8] sm:$0xff]
    %v227 = vld [vmem:[#allocation5 + $0x2f0] sm:$0xff]
    %v228 = vld [vmem:[#allocation5 + $0x2f8] sm:$0xff]
    %v229 = vld [vmem:[#allocation5 + $0x300] sm:$0xff]
    %v230 = vld [vmem:[#allocation5 + $0x308] sm:$0xff]
    %v231 = vld [vmem:[#allocation5 + $0x310] sm:$0xff]
    %v232 = vld [vmem:[#allocation5 + $0x318] sm:$0xff]
    %v233 = vld [vmem:[#allocation5 + $0x320] sm:$0xff]
    %v234 = vld [vmem:[#allocation5 + $0x328] sm:$0xff]
    %v235 = vld [vmem:[#allocation5 + $0x330] sm:$0xff]
    %v236 = vld [vmem:[#allocation5 + $0x338] sm:$0xff]
    %v237 = vld [vmem:[#allocation5 + $0x340] sm:$0xff]
    %v238 = vld [vmem:[#allocation5 + $0x348] sm:$0xff]
    %v239 = vld [vmem:[#allocation5 + $0x350] sm:$0xff]
    %v240 = vld [vmem:[#allocation5 + $0x358] sm:$0xff]
    %v241 = vld [vmem:[#allocation5 + $0x360] sm:$0xff]
    %v242 = vld [vmem:[#allocation5 + $0x368] sm:$0xff]
    %v243 = vld [vmem:[#allocation5 + $0x370] sm:$0xff]
    %v244 = vld [vmem:[#allocation5 + $0x378] sm:$0xff]
    %v245 = vld [vmem:[#allocation5 + $0x380] sm:$0xff]
    %v246 = vld [vmem:[#allocation5 + $0x388] sm:$0xff]
    %v247 = vld [vmem:[#allocation5 + $0x390] sm:$0xff]
    %v248 = vld [vmem:[#allocation5 + $0x398] sm:$0xff]
    %v249 = vld [vmem:[#allocation5 + $0x3a0] sm:$0xff]
    %v250 = vld [vmem:[#allocation5 + $0x3a8] sm:$0xff]
    %v251 = vld [vmem:[#allocation5 + $0x3b0] sm:$0xff]
    %v252 = vld [vmem:[#allocation5 + $0x3b8] sm:$0xff]
    %v253 = vld [vmem:[#allocation5 + $0x3c0] sm:$0xff]
    %v254 = vld [vmem:[#allocation5 + $0x3c8] sm:$0xff]
    %v255 = vld [vmem:[#allocation5 + $0x3d0] sm:$0xff]
    %v256 = vld [vmem:[#allocation5 + $0x3d8] sm:$0xff]
    %v257 = vld [vmem:[#allocation5 + $0x3e0] sm:$0xff]
    %v258 = vld [vmem:[#allocation5 + $0x3e8] sm:$0xff]
    %v259 = vld [vmem:[#allocation5 + $0x3f0] sm:$0xff]
    %v260 = vld [vmem:[#allocation5 + $0x3f8] sm:$0xff]
    %v261 = vld [vmem:[#allocation5 + $0x400] sm:$0xff]
    %v262 = vld [vmem:[#allocation5 + $0x408] sm:$0xff]
    %v263 = vld [vmem:[#allocation5 + $0x410] sm:$0xff]
    %v264 = vld [vmem:[#allocation5 + $0x418] sm:$0xff]
    %v265 = vld [vmem:[#allocation5 + $0x420] sm:$0xff]
    %v266 = vld [vmem:[#allocation5 + $0x428] sm:$0xff]
    %v267 = vld [vmem:[#allocation5 + $0x430] sm:$0xff]
    %v268 = vld [vmem:[#allocation5 + $0x438] sm:$0xff]
    %v269 = vld [vmem:[#allocation5 + $0x440] sm:$0xff]
    %v270 = vld [vmem:[#allocation5 + $0x448] sm:$0xff]
    %v271 = vld [vmem:[#allocation5 + $0x450] sm:$0xff]
    %v272 = vld [vmem:[#allocation5 + $0x458] sm:$0xff]
    %v273 = vld [vmem:[#allocation5 + $0x460] sm:$0xff]
    %v274 = vld [vmem:[#allocation5 + $0x468] sm:$0xff]
    %v275 = vld [vmem:[#allocation5 + $0x470] sm:$0xff]
    %v276 = vld [vmem:[#allocation5 + $0x478] sm:$0xff]
    %v277 = vld [vmem:[#allocation5 + $0x480] sm:$0xff]
    %v278 = vld [vmem:[#allocation5 + $0x488] sm:$0xff]
    %v279 = vld [vmem:[#allocation5 + $0x490] sm:$0xff]
    %v280 = vld [vmem:[#allocation5 + $0x498] sm:$0xff]
    %v281 = vld [vmem:[#allocation5 + $0x4a0] sm:$0xff]
    %v282 = vld [vmem:[#allocation5 + $0x4a8] sm:$0xff]
    %v283 = vld [vmem:[#allocation5 + $0x4b0] sm:$0xff]
    %v284 = vld [vmem:[#allocation5 + $0x4b8] sm:$0xff]
    %v285 = vld [vmem:[#allocation5 + $0x4c0] sm:$0xff]
    %v286 = vld [vmem:[#allocation5 + $0x4c8] sm:$0xff]
    %v287 = vld [vmem:[#allocation5 + $0x4d0] sm:$0xff]
    %v288 = vld [vmem:[#allocation5 + $0x4d8] sm:$0xff]
    %v289 = vld [vmem:[#allocation5 + $0x4e0] sm:$0xff]
    %v290 = vld [vmem:[#allocation5 + $0x4e8] sm:$0xff]
    %v291 = vld [vmem:[#allocation5 + $0x4f0] sm:$0xff]
    %v292 = vld [vmem:[#allocation5 + $0x4f8] sm:$0xff]
    %v293 = vld [vmem:[#allocation5 + $0x500] sm:$0xff]
    %v294 = vld [vmem:[#allocation5 + $0x508] sm:$0xff]
    %v295 = vld [vmem:[#allocation5 + $0x510] sm:$0xff]
    %v296 = vld [vmem:[#allocation5 + $0x518] sm:$0xff]
    %v297 = vld [vmem:[#allocation5 + $0x520] sm:$0xff]
    %v298 = vld [vmem:[#allocation5 + $0x528] sm:$0xff]
    %v299 = vld [vmem:[#allocation5 + $0x530] sm:$0xff]
    %v300 = vld [vmem:[#allocation5 + $0x538] sm:$0xff]
    %v301 = vld [vmem:[#allocation5 + $0x540] sm:$0xff]
    %v302 = vld [vmem:[#allocation5 + $0x548] sm:$0xff]
    %v303 = vld [vmem:[#allocation5 + $0x550] sm:$0xff]
    %v304 = vld [vmem:[#allocation5 + $0x558] sm:$0xff]
    %v305 = vld [vmem:[#allocation5 + $0x560] sm:$0xff]
    %v306 = vld [vmem:[#allocation5 + $0x568] sm:$0xff]
    %v307 = vld [vmem:[#allocation5 + $0x570] sm:$0xff]
    %v308 = vld [vmem:[#allocation5 + $0x578] sm:$0xff]
    %v309 = vld [vmem:[#allocation5 + $0x580] sm:$0xff]
    %v310 = vld [vmem:[#allocation5 + $0x588] sm:$0xff]
    %v311 = vld [vmem:[#allocation5 + $0x590] sm:$0xff]
    %v312 = vld [vmem:[#allocation5 + $0x598] sm:$0xff]
    %v313 = vld [vmem:[#allocation5 + $0x5a0] sm:$0xff]
    %v314 = vld [vmem:[#allocation5 + $0x5a8] sm:$0xff]
    %v315 = vld [vmem:[#allocation5 + $0x5b0] sm:$0xff]
    %v316 = vld [vmem:[#allocation5 + $0x5b8] sm:$0xff]
    %v317 = vld [vmem:[#allocation5 + $0x5c0] sm:$0xff]
    %v318 = vld [vmem:[#allocation5 + $0x5c8] sm:$0xff]
    %v319 = vld [vmem:[#allocation5 + $0x5d0] sm:$0xff]
    %v320 = vld [vmem:[#allocation5 + $0x5d8] sm:$0xff]
    %v321 = vld [vmem:[#allocation5 + $0x5e0] sm:$0xff]
    %v322 = vld [vmem:[#allocation5 + $0x5e8] sm:$0xff]
    %v323 = vld [vmem:[#allocation5 + $0x5f0] sm:$0xff]
    %v324 = vld [vmem:[#allocation5 + $0x5f8] sm:$0xff]
    %v325 = vld [vmem:[#allocation5 + $0x600] sm:$0xff]
    %v326 = vld [vmem:[#allocation5 + $0x608] sm:$0xff]
    %v327 = vld [vmem:[#allocation5 + $0x610] sm:$0xff]
    %v328 = vld [vmem:[#allocation5 + $0x618] sm:$0xff]
    %v329 = vld [vmem:[#allocation5 + $0x620] sm:$0xff]
    %v330 = vld [vmem:[#allocation5 + $0x628] sm:$0xff]
    %v331 = vld [vmem:[#allocation5 + $0x630] sm:$0xff]
    %v332 = vld [vmem:[#allocation5 + $0x638] sm:$0xff]
    %v333 = vld [vmem:[#allocation5 + $0x640] sm:$0xff]
    %v334 = vld [vmem:[#allocation5 + $0x648] sm:$0xff]
    %v335 = vld [vmem:[#allocation5 + $0x650] sm:$0xff]
    %v336 = vld [vmem:[#allocation5 + $0x658] sm:$0xff]
    %v337 = vld [vmem:[#allocation5 + $0x660] sm:$0xff]
    %v338 = vld [vmem:[#allocation5 + $0x668] sm:$0xff]
    %v339 = vld [vmem:[#allocation5 + $0x670] sm:$0xff]
    %v340 = vld [vmem:[#allocation5 + $0x678] sm:$0xff]
    %v341 = vld [vmem:[#allocation5 + $0x680] sm:$0xff]
    %v342 = vld [vmem:[#allocation5 + $0x688] sm:$0xff]
    %v343 = vld [vmem:[#allocation5 + $0x690] sm:$0xff]
    %v344 = vld [vmem:[#allocation5 + $0x698] sm:$0xff]
    %v345 = vld [vmem:[#allocation5 + $0x6a0] sm:$0xff]
    %v346 = vld [vmem:[#allocation5 + $0x6a8] sm:$0xff]
    %v347 = vld [vmem:[#allocation5 + $0x6b0] sm:$0xff]
    %v348 = vld [vmem:[#allocation5 + $0x6b8] sm:$0xff]
    %v349 = vld [vmem:[#allocation5 + $0x6c0] sm:$0xff]
    %v350 = vld [vmem:[#allocation5 + $0x6c8] sm:$0xff]
    %v351 = vld [vmem:[#allocation5 + $0x6d0] sm:$0xff]
    %v352 = vld [vmem:[#allocation5 + $0x6d8] sm:$0xff]
    %v353 = vld [vmem:[#allocation5 + $0x6e0] sm:$0xff]
    %v354 = vld [vmem:[#allocation5 + $0x6e8] sm:$0xff]
    %v355 = vld [vmem:[#allocation5 + $0x6f0] sm:$0xff]
    %v356 = vld [vmem:[#allocation5 + $0x6f8] sm:$0xff]
    %v357 = vld [vmem:[#allocation7] sm:$0xf]
    %v359 = vperm.slane %v357, 0
    %v360 = vperm.slane %v357, 1
    %v361 = vperm.slane %v357, 2
    %v362 = vperm.slane %v357, 3
    %v375 = vunpack.c.l.b16 %v125
    %v376 = vunpack.c.h.b16 %v125
    %v377 = vunpack.c.l.b16 %v126
    %v378 = vunpack.c.h.b16 %v126
    %v379 = vunpack.c.l.b16 %v127
    %v380 = vunpack.c.h.b16 %v127
    %v381 = vunpack.c.l.b16 %v128
    %v382 = vunpack.c.l.b16 %v129
    %v383 = vunpack.c.h.b16 %v129
    %v384 = vunpack.c.l.b16 %v130
    %v385 = vunpack.c.h.b16 %v130
    %v386 = vunpack.c.l.b16 %v131
    %v387 = vunpack.c.h.b16 %v131
    %v388 = vunpack.c.l.b16 %v132
    %v389 = vpack.c.b16 %v382, %v375
    %v390 = vpack.c.b16 %v383, %v376
    %v391 = vpack.c.b16 %v384, %v377
    %v392 = vpack.c.b16 %v385, %v378
    %v393 = vpack.c.b16 %v386, %v379
    %v394 = vpack.c.b16 %v387, %v380
    %v395 = vpack.c.b16 %v388, %v381
    %v627 = vunpack.c.l.b16 %v133
    %v628 = vunpack.c.h.b16 %v133
    %v629 = vunpack.c.l.b16 %v134
    %v630 = vunpack.c.h.b16 %v134
    %v631 = vunpack.c.l.b16 %v135
    %v632 = vunpack.c.h.b16 %v135
    %v633 = vunpack.c.l.b16 %v136
    %v634 = vunpack.c.h.b16 %v136
    %v635 = vunpack.c.l.b16 %v137
    %v636 = vunpack.c.h.b16 %v137
    %v637 = vunpack.c.l.b16 %v138
    %v638 = vunpack.c.h.b16 %v138
    %v639 = vunpack.c.l.b16 %v139
    %v640 = vunpack.c.h.b16 %v139
    %v641 = vunpack.c.l.b16 %v140
    %v642 = vunpack.c.h.b16 %v140
    %v643 = vunpack.c.l.b16 %v141
    %v644 = vunpack.c.h.b16 %v141
    %v645 = vunpack.c.l.b16 %v142
    %v646 = vunpack.c.h.b16 %v142
    %v647 = vunpack.c.l.b16 %v143
    %v648 = vunpack.c.h.b16 %v143
    %v649 = vunpack.c.l.b16 %v144
    %v650 = vunpack.c.h.b16 %v144
    %v651 = vunpack.c.l.b16 %v145
    %v652 = vunpack.c.h.b16 %v145
    %v653 = vunpack.c.l.b16 %v146
    %v654 = vunpack.c.h.b16 %v146
    %v655 = vunpack.c.l.b16 %v147
    %v656 = vunpack.c.h.b16 %v147
    %v657 = vunpack.c.l.b16 %v148
    %v658 = vunpack.c.h.b16 %v148
    %v659 = vunpack.c.l.b16 %v149
    %v660 = vunpack.c.h.b16 %v149
    %v661 = vunpack.c.l.b16 %v150
    %v662 = vunpack.c.h.b16 %v150
    %v663 = vunpack.c.l.b16 %v151
    %v664 = vunpack.c.h.b16 %v151
    %v665 = vunpack.c.l.b16 %v152
    %v666 = vunpack.c.h.b16 %v152
    %v667 = vunpack.c.l.b16 %v153
    %v668 = vunpack.c.h.b16 %v153
    %v669 = vunpack.c.l.b16 %v154
    %v670 = vunpack.c.h.b16 %v154
    %v671 = vunpack.c.l.b16 %v155
    %v672 = vunpack.c.h.b16 %v155
    %v673 = vunpack.c.l.b16 %v156
    %v674 = vunpack.c.h.b16 %v156
    %v675 = vunpack.c.l.b16 %v157
    %v676 = vunpack.c.h.b16 %v157
    %v677 = vunpack.c.l.b16 %v158
    %v678 = vunpack.c.h.b16 %v158
    %v679 = vunpack.c.l.b16 %v159
    %v680 = vunpack.c.h.b16 %v159
    %v681 = vunpack.c.l.b16 %v160
    %v682 = vunpack.c.h.b16 %v160
    %v683 = vunpack.c.l.b16 %v161
    %v684 = vunpack.c.h.b16 %v161
    %v685 = vunpack.c.l.b16 %v162
    %v686 = vunpack.c.h.b16 %v162
    %v687 = vunpack.c.l.b16 %v163
    %v688 = vunpack.c.h.b16 %v163
    %v689 = vunpack.c.l.b16 %v164
    %v690 = vunpack.c.h.b16 %v164
    %v691 = vunpack.c.l.b16 %v165
    %v692 = vunpack.c.h.b16 %v165
    %v693 = vunpack.c.l.b16 %v166
    %v694 = vunpack.c.h.b16 %v166
    %v695 = vunpack.c.l.b16 %v167
    %v696 = vunpack.c.h.b16 %v167
    %v697 = vunpack.c.l.b16 %v168
    %v698 = vunpack.c.h.b16 %v168
    %v699 = vunpack.c.l.b16 %v169
    %v700 = vunpack.c.h.b16 %v169
    %v701 = vunpack.c.l.b16 %v170
    %v702 = vunpack.c.h.b16 %v170
    %v703 = vunpack.c.l.b16 %v171
    %v704 = vunpack.c.h.b16 %v171
    %v705 = vunpack.c.l.b16 %v172
    %v706 = vunpack.c.h.b16 %v172
    %v707 = vunpack.c.l.b16 %v173
    %v708 = vunpack.c.h.b16 %v173
    %v709 = vunpack.c.l.b16 %v174
    %v710 = vunpack.c.h.b16 %v174
    %v711 = vunpack.c.l.b16 %v175
    %v712 = vunpack.c.h.b16 %v175
    %v713 = vunpack.c.l.b16 %v176
    %v714 = vunpack.c.h.b16 %v176
    %v715 = vunpack.c.l.b16 %v177
    %v716 = vunpack.c.h.b16 %v177
    %v717 = vunpack.c.l.b16 %v178
    %v718 = vunpack.c.h.b16 %v178
    %v719 = vunpack.c.l.b16 %v179
    %v720 = vunpack.c.h.b16 %v179
    %v721 = vunpack.c.l.b16 %v180
    %v722 = vunpack.c.h.b16 %v180
    %v723 = vunpack.c.l.b16 %v181
    %v724 = vunpack.c.h.b16 %v181
    %v725 = vunpack.c.l.b16 %v182
    %v726 = vunpack.c.h.b16 %v182
    %v727 = vunpack.c.l.b16 %v183
    %v728 = vunpack.c.h.b16 %v183
    %v729 = vunpack.c.l.b16 %v184
    %v730 = vunpack.c.h.b16 %v184
    %v731 = vunpack.c.l.b16 %v185
    %v732 = vunpack.c.h.b16 %v185
    %v733 = vunpack.c.l.b16 %v186
    %v734 = vunpack.c.h.b16 %v186
    %v735 = vunpack.c.l.b16 %v187
    %v736 = vunpack.c.h.b16 %v187
    %v737 = vunpack.c.l.b16 %v188
    %v738 = vunpack.c.h.b16 %v188
    %v739 = vunpack.c.l.b16 %v189
    %v740 = vunpack.c.h.b16 %v189
    %v741 = vunpack.c.l.b16 %v190
    %v742 = vunpack.c.h.b16 %v190
    %v743 = vunpack.c.l.b16 %v191
    %v744 = vunpack.c.h.b16 %v191
    %v745 = vunpack.c.l.b16 %v192
    %v746 = vunpack.c.h.b16 %v192
    %v747 = vunpack.c.l.b16 %v193
    %v748 = vunpack.c.h.b16 %v193
    %v749 = vunpack.c.l.b16 %v194
    %v750 = vunpack.c.h.b16 %v194
    %v751 = vunpack.c.l.b16 %v195
    %v752 = vunpack.c.h.b16 %v195
    %v753 = vunpack.c.l.b16 %v196
    %v754 = vunpack.c.h.b16 %v196
    %v755 = vunpack.c.l.b16 %v197
    %v756 = vunpack.c.h.b16 %v197
    %v757 = vunpack.c.l.b16 %v198
    %v758 = vunpack.c.h.b16 %v198
    %v759 = vunpack.c.l.b16 %v199
    %v760 = vunpack.c.h.b16 %v199
    %v761 = vunpack.c.l.b16 %v200
    %v762 = vunpack.c.h.b16 %v200
    %v763 = vunpack.c.l.b16 %v201
    %v764 = vunpack.c.h.b16 %v201
    %v765 = vunpack.c.l.b16 %v202
    %v766 = vunpack.c.h.b16 %v202
    %v767 = vunpack.c.l.b16 %v203
    %v768 = vunpack.c.h.b16 %v203
    %v769 = vunpack.c.l.b16 %v204
    %v770 = vunpack.c.h.b16 %v204
    %v771 = vunpack.c.l.b16 %v205
    %v772 = vunpack.c.h.b16 %v205
    %v773 = vunpack.c.l.b16 %v206
    %v774 = vunpack.c.h.b16 %v206
    %v775 = vunpack.c.l.b16 %v207
    %v776 = vunpack.c.h.b16 %v207
    %v777 = vunpack.c.l.b16 %v208
    %v778 = vunpack.c.h.b16 %v208
    %v779 = vunpack.c.l.b16 %v209
    %v780 = vunpack.c.h.b16 %v209
    %v781 = vunpack.c.l.b16 %v210
    %v782 = vunpack.c.h.b16 %v210
    %v783 = vunpack.c.l.b16 %v211
    %v784 = vunpack.c.h.b16 %v211
    %v785 = vunpack.c.l.b16 %v212
    %v786 = vunpack.c.h.b16 %v212
    %v787 = vunpack.c.l.b16 %v213
    %v788 = vunpack.c.h.b16 %v213
    %v789 = vunpack.c.l.b16 %v214
    %v790 = vunpack.c.h.b16 %v214
    %v791 = vunpack.c.l.b16 %v215
    %v792 = vunpack.c.h.b16 %v215
    %v793 = vunpack.c.l.b16 %v216
    %v794 = vunpack.c.h.b16 %v216
    %v795 = vunpack.c.l.b16 %v217
    %v796 = vunpack.c.h.b16 %v217
    %v797 = vunpack.c.l.b16 %v218
    %v798 = vunpack.c.h.b16 %v218
    %v799 = vunpack.c.l.b16 %v219
    %v800 = vunpack.c.h.b16 %v219
    %v801 = vunpack.c.l.b16 %v220
    %v802 = vunpack.c.h.b16 %v220
    %v803 = vunpack.c.l.b16 %v221
    %v804 = vunpack.c.h.b16 %v221
    %v805 = vunpack.c.l.b16 %v222
    %v806 = vunpack.c.h.b16 %v222
    %v807 = vunpack.c.l.b16 %v223
    %v808 = vunpack.c.h.b16 %v223
    %v809 = vunpack.c.l.b16 %v224
    %v810 = vunpack.c.h.b16 %v224
    %v811 = vunpack.c.l.b16 %v225
    %v812 = vunpack.c.h.b16 %v225
    %v813 = vunpack.c.l.b16 %v226
    %v814 = vunpack.c.h.b16 %v226
    %v815 = vunpack.c.l.b16 %v227
    %v816 = vunpack.c.h.b16 %v227
    %v817 = vunpack.c.l.b16 %v228
    %v818 = vunpack.c.h.b16 %v228
    %v819 = vunpack.c.l.b16 %v229
    %v820 = vunpack.c.h.b16 %v229
    %v821 = vunpack.c.l.b16 %v230
    %v822 = vunpack.c.h.b16 %v230
    %v823 = vunpack.c.l.b16 %v231
    %v824 = vunpack.c.h.b16 %v231
    %v825 = vunpack.c.l.b16 %v232
    %v826 = vunpack.c.h.b16 %v232
    %v827 = vunpack.c.l.b16 %v233
    %v828 = vunpack.c.h.b16 %v233
    %v829 = vunpack.c.l.b16 %v234
    %v830 = vunpack.c.h.b16 %v234
    %v831 = vunpack.c.l.b16 %v235
    %v832 = vunpack.c.h.b16 %v235
    %v833 = vunpack.c.l.b16 %v236
    %v834 = vunpack.c.h.b16 %v236
    %v835 = vunpack.c.l.b16 %v237
    %v836 = vunpack.c.h.b16 %v237
    %v837 = vunpack.c.l.b16 %v238
    %v838 = vunpack.c.h.b16 %v238
    %v839 = vunpack.c.l.b16 %v239
    %v840 = vunpack.c.h.b16 %v239
    %v841 = vunpack.c.l.b16 %v240
    %v842 = vunpack.c.h.b16 %v240
    %v843 = vunpack.c.l.b16 %v241
    %v844 = vunpack.c.h.b16 %v241
    %v845 = vunpack.c.l.b16 %v242
    %v846 = vunpack.c.h.b16 %v242
    %v847 = vunpack.c.l.b16 %v243
    %v848 = vunpack.c.h.b16 %v243
    %v849 = vunpack.c.l.b16 %v244
    %v850 = vunpack.c.h.b16 %v244
    %v851 = vunpack.c.l.b16 %v245
    %v852 = vunpack.c.h.b16 %v245
    %v853 = vunpack.c.l.b16 %v246
    %v854 = vunpack.c.h.b16 %v246
    %v855 = vunpack.c.l.b16 %v247
    %v856 = vunpack.c.h.b16 %v247
    %v857 = vunpack.c.l.b16 %v248
    %v858 = vunpack.c.h.b16 %v248
    %v859 = vunpack.c.l.b16 %v249
    %v860 = vunpack.c.h.b16 %v249
    %v861 = vunpack.c.l.b16 %v250
    %v862 = vunpack.c.h.b16 %v250
    %v863 = vunpack.c.l.b16 %v251
    %v864 = vunpack.c.h.b16 %v251
    %v865 = vunpack.c.l.b16 %v252
    %v866 = vunpack.c.h.b16 %v252
    %v867 = vunpack.c.l.b16 %v253
    %v868 = vunpack.c.h.b16 %v253
    %v869 = vunpack.c.l.b16 %v254
    %v870 = vunpack.c.h.b16 %v254
    %v871 = vunpack.c.l.b16 %v255
    %v872 = vunpack.c.h.b16 %v255
    %v873 = vunpack.c.l.b16 %v256
    %v874 = vunpack.c.h.b16 %v256
    %v875 = vunpack.c.l.b16 %v257
    %v876 = vunpack.c.h.b16 %v257
    %v877 = vunpack.c.l.b16 %v258
    %v878 = vunpack.c.h.b16 %v258
    %v879 = vunpack.c.l.b16 %v259
    %v880 = vunpack.c.h.b16 %v259
    %v881 = vunpack.c.l.b16 %v260
    %v882 = vunpack.c.h.b16 %v260
    %v883 = vunpack.c.l.b16 %v261
    %v884 = vunpack.c.h.b16 %v261
    %v885 = vunpack.c.l.b16 %v262
    %v886 = vunpack.c.h.b16 %v262
    %v887 = vunpack.c.l.b16 %v263
    %v888 = vunpack.c.h.b16 %v263
    %v889 = vunpack.c.l.b16 %v264
    %v890 = vunpack.c.h.b16 %v264
    %v891 = vunpack.c.l.b16 %v265
    %v892 = vunpack.c.h.b16 %v265
    %v893 = vunpack.c.l.b16 %v266
    %v894 = vunpack.c.h.b16 %v266
    %v895 = vunpack.c.l.b16 %v267
    %v896 = vunpack.c.h.b16 %v267
    %v897 = vunpack.c.l.b16 %v268
    %v898 = vunpack.c.h.b16 %v268
    %v899 = vunpack.c.l.b16 %v269
    %v900 = vunpack.c.h.b16 %v269
    %v901 = vunpack.c.l.b16 %v270
    %v902 = vunpack.c.h.b16 %v270
    %v903 = vunpack.c.l.b16 %v271
    %v904 = vunpack.c.h.b16 %v271
    %v905 = vunpack.c.l.b16 %v272
    %v906 = vunpack.c.h.b16 %v272
    %v907 = vunpack.c.l.b16 %v273
    %v908 = vunpack.c.h.b16 %v273
    %v909 = vunpack.c.l.b16 %v274
    %v910 = vunpack.c.h.b16 %v274
    %v911 = vunpack.c.l.b16 %v275
    %v912 = vunpack.c.h.b16 %v275
    %v913 = vunpack.c.l.b16 %v276
    %v914 = vunpack.c.h.b16 %v276
    %v915 = vunpack.c.l.b16 %v277
    %v916 = vunpack.c.h.b16 %v277
    %v917 = vunpack.c.l.b16 %v278
    %v918 = vunpack.c.h.b16 %v278
    %v919 = vunpack.c.l.b16 %v279
    %v920 = vunpack.c.h.b16 %v279
    %v921 = vunpack.c.l.b16 %v280
    %v922 = vunpack.c.h.b16 %v280
    %v923 = vunpack.c.l.b16 %v281
    %v924 = vunpack.c.h.b16 %v281
    %v925 = vunpack.c.l.b16 %v282
    %v926 = vunpack.c.h.b16 %v282
    %v927 = vunpack.c.l.b16 %v283
    %v928 = vunpack.c.h.b16 %v283
    %v929 = vunpack.c.l.b16 %v284
    %v930 = vunpack.c.h.b16 %v284
    %v931 = vunpack.c.l.b16 %v285
    %v932 = vunpack.c.h.b16 %v285
    %v933 = vunpack.c.l.b16 %v286
    %v934 = vunpack.c.h.b16 %v286
    %v935 = vunpack.c.l.b16 %v287
    %v936 = vunpack.c.h.b16 %v287
    %v937 = vunpack.c.l.b16 %v288
    %v938 = vunpack.c.h.b16 %v288
    %v939 = vunpack.c.l.b16 %v289
    %v940 = vunpack.c.h.b16 %v289
    %v941 = vunpack.c.l.b16 %v290
    %v942 = vunpack.c.h.b16 %v290
    %v943 = vunpack.c.l.b16 %v291
    %v944 = vunpack.c.h.b16 %v291
    %v945 = vunpack.c.l.b16 %v292
    %v946 = vunpack.c.h.b16 %v292
    %v947 = vunpack.c.l.b16 %v293
    %v948 = vunpack.c.h.b16 %v293
    %v949 = vunpack.c.l.b16 %v294
    %v950 = vunpack.c.h.b16 %v294
    %v951 = vunpack.c.l.b16 %v295
    %v952 = vunpack.c.h.b16 %v295
    %v953 = vunpack.c.l.b16 %v296
    %v954 = vunpack.c.h.b16 %v296
    %v955 = vunpack.c.l.b16 %v297
    %v956 = vunpack.c.h.b16 %v297
    %v957 = vunpack.c.l.b16 %v298
    %v958 = vunpack.c.h.b16 %v298
    %v959 = vunpack.c.l.b16 %v299
    %v960 = vunpack.c.h.b16 %v299
    %v961 = vunpack.c.l.b16 %v300
    %v962 = vunpack.c.h.b16 %v300
    %v963 = vunpack.c.l.b16 %v301
    %v964 = vunpack.c.h.b16 %v301
    %v965 = vunpack.c.l.b16 %v302
    %v966 = vunpack.c.h.b16 %v302
    %v967 = vunpack.c.l.b16 %v303
    %v968 = vunpack.c.h.b16 %v303
    %v969 = vunpack.c.l.b16 %v304
    %v970 = vunpack.c.h.b16 %v304
    %v971 = vunpack.c.l.b16 %v305
    %v972 = vunpack.c.h.b16 %v305
    %v973 = vunpack.c.l.b16 %v306
    %v974 = vunpack.c.h.b16 %v306
    %v975 = vunpack.c.l.b16 %v307
    %v976 = vunpack.c.h.b16 %v307
    %v977 = vunpack.c.l.b16 %v308
    %v978 = vunpack.c.h.b16 %v308
    %v979 = vunpack.c.l.b16 %v309
    %v980 = vunpack.c.h.b16 %v309
    %v981 = vunpack.c.l.b16 %v310
    %v982 = vunpack.c.h.b16 %v310
    %v983 = vunpack.c.l.b16 %v311
    %v984 = vunpack.c.h.b16 %v311
    %v985 = vunpack.c.l.b16 %v312
    %v986 = vunpack.c.h.b16 %v312
    %v987 = vunpack.c.l.b16 %v313
    %v988 = vunpack.c.h.b16 %v313
    %v989 = vunpack.c.l.b16 %v314
    %v990 = vunpack.c.h.b16 %v314
    %v991 = vunpack.c.l.b16 %v315
    %v992 = vunpack.c.h.b16 %v315
    %v993 = vunpack.c.l.b16 %v316
    %v994 = vunpack.c.h.b16 %v316
    %v995 = vunpack.c.l.b16 %v317
    %v996 = vunpack.c.h.b16 %v317
    %v997 = vunpack.c.l.b16 %v318
    %v998 = vunpack.c.h.b16 %v318
    %v999 = vunpack.c.l.b16 %v319
    %v1000 = vunpack.c.h.b16 %v319
    %v1001 = vunpack.c.l.b16 %v320
    %v1002 = vunpack.c.h.b16 %v320
    %v1003 = vunpack.c.l.b16 %v321
    %v1004 = vunpack.c.h.b16 %v321
    %v1005 = vunpack.c.l.b16 %v322
    %v1006 = vunpack.c.h.b16 %v322
    %v1007 = vunpack.c.l.b16 %v323
    %v1008 = vunpack.c.h.b16 %v323
    %v1009 = vunpack.c.l.b16 %v324
    %v1010 = vunpack.c.h.b16 %v324
    %v1011 = vunpack.c.l.b16 %v325
    %v1012 = vunpack.c.h.b16 %v325
    %v1013 = vunpack.c.l.b16 %v326
    %v1014 = vunpack.c.h.b16 %v326
    %v1015 = vunpack.c.l.b16 %v327
    %v1016 = vunpack.c.h.b16 %v327
    %v1017 = vunpack.c.l.b16 %v328
    %v1018 = vunpack.c.h.b16 %v328
    %v1019 = vunpack.c.l.b16 %v329
    %v1020 = vunpack.c.h.b16 %v329
    %v1021 = vunpack.c.l.b16 %v330
    %v1022 = vunpack.c.h.b16 %v330
    %v1023 = vunpack.c.l.b16 %v331
    %v1024 = vunpack.c.h.b16 %v331
    %v1025 = vunpack.c.l.b16 %v332
    %v1026 = vunpack.c.h.b16 %v332
    %v1027 = vunpack.c.l.b16 %v333
    %v1028 = vunpack.c.h.b16 %v333
    %v1029 = vunpack.c.l.b16 %v334
    %v1030 = vunpack.c.h.b16 %v334
    %v1031 = vunpack.c.l.b16 %v335
    %v1032 = vunpack.c.h.b16 %v335
    %v1033 = vunpack.c.l.b16 %v336
    %v1034 = vunpack.c.h.b16 %v336
    %v1035 = vunpack.c.l.b16 %v337
    %v1036 = vunpack.c.h.b16 %v337
    %v1037 = vunpack.c.l.b16 %v338
    %v1038 = vunpack.c.h.b16 %v338
    %v1039 = vunpack.c.l.b16 %v339
    %v1040 = vunpack.c.h.b16 %v339
    %v1041 = vunpack.c.l.b16 %v340
    %v1042 = vunpack.c.h.b16 %v340
    %v1043 = vunpack.c.l.b16 %v341
    %v1044 = vunpack.c.h.b16 %v341
    %v1045 = vunpack.c.l.b16 %v342
    %v1046 = vunpack.c.h.b16 %v342
    %v1047 = vunpack.c.l.b16 %v343
    %v1048 = vunpack.c.h.b16 %v343
    %v1049 = vunpack.c.l.b16 %v344
    %v1050 = vunpack.c.h.b16 %v344
    %v1051 = vunpack.c.l.b16 %v345
    %v1052 = vunpack.c.h.b16 %v345
    %v1053 = vunpack.c.l.b16 %v346
    %v1054 = vunpack.c.h.b16 %v346
    %v1055 = vunpack.c.l.b16 %v347
    %v1056 = vunpack.c.h.b16 %v347
    %v1057 = vunpack.c.l.b16 %v348
    %v1058 = vunpack.c.h.b16 %v348
    %v1059 = vunpack.c.l.b16 %v349
    %v1060 = vunpack.c.h.b16 %v349
    %v1061 = vunpack.c.l.b16 %v350
    %v1062 = vunpack.c.h.b16 %v350
    %v1063 = vunpack.c.l.b16 %v351
    %v1064 = vunpack.c.h.b16 %v351
    %v1065 = vunpack.c.l.b16 %v352
    %v1066 = vunpack.c.h.b16 %v352
    %v1067 = vunpack.c.l.b16 %v353
    %v1068 = vunpack.c.h.b16 %v353
    %v1069 = vunpack.c.l.b16 %v354
    %v1070 = vunpack.c.h.b16 %v354
    %v1071 = vunpack.c.l.b16 %v355
    %v1072 = vunpack.c.h.b16 %v355
    %v1073 = vunpack.c.l.b16 %v356
    %v1074 = vunpack.c.h.b16 %v356
    %v1075 = vpack.c.b16 %v631, %v627
    %v1076 = vpack.c.b16 %v632, %v628
    %v1077 = vpack.c.b16 %v633, %v629
    %v1078 = vpack.c.b16 %v634, %v630
    %v1079 = vpack.c.b16 %v639, %v635
    %v1080 = vpack.c.b16 %v640, %v636
    %v1081 = vpack.c.b16 %v641, %v637
    %v1082 = vpack.c.b16 %v642, %v638
    %v1083 = vpack.c.b16 %v647, %v643
    %v1084 = vpack.c.b16 %v648, %v644
    %v1085 = vpack.c.b16 %v649, %v645
    %v1086 = vpack.c.b16 %v650, %v646
    %v1087 = vpack.c.b16 %v655, %v651
    %v1088 = vpack.c.b16 %v656, %v652
    %v1089 = vpack.c.b16 %v657, %v653
    %v1090 = vpack.c.b16 %v658, %v654
    %v1091 = vpack.c.b16 %v663, %v659
    %v1092 = vpack.c.b16 %v664, %v660
    %v1093 = vpack.c.b16 %v665, %v661
    %v1094 = vpack.c.b16 %v666, %v662
    %v1095 = vpack.c.b16 %v671, %v667
    %v1096 = vpack.c.b16 %v672, %v668
    %v1097 = vpack.c.b16 %v673, %v669
    %v1098 = vpack.c.b16 %v674, %v670
    %v1099 = vpack.c.b16 %v679, %v675
    %v1100 = vpack.c.b16 %v680, %v676
    %v1101 = vpack.c.b16 %v681, %v677
    %v1102 = vpack.c.b16 %v682, %v678
    %v1103 = vpack.c.b16 %v687, %v683
    %v1104 = vpack.c.b16 %v688, %v684
    %v1105 = vpack.c.b16 %v689, %v685
    %v1106 = vpack.c.b16 %v690, %v686
    %v1107 = vpack.c.b16 %v695, %v691
    %v1108 = vpack.c.b16 %v696, %v692
    %v1109 = vpack.c.b16 %v697, %v693
    %v1110 = vpack.c.b16 %v698, %v694
    %v1111 = vpack.c.b16 %v703, %v699
    %v1112 = vpack.c.b16 %v704, %v700
    %v1113 = vpack.c.b16 %v705, %v701
    %v1114 = vpack.c.b16 %v706, %v702
    %v1115 = vpack.c.b16 %v711, %v707
    %v1116 = vpack.c.b16 %v712, %v708
    %v1117 = vpack.c.b16 %v713, %v709
    %v1118 = vpack.c.b16 %v714, %v710
    %v1119 = vpack.c.b16 %v719, %v715
    %v1120 = vpack.c.b16 %v720, %v716
    %v1121 = vpack.c.b16 %v721, %v717
    %v1122 = vpack.c.b16 %v722, %v718
    %v1123 = vpack.c.b16 %v727, %v723
    %v1124 = vpack.c.b16 %v728, %v724
    %v1125 = vpack.c.b16 %v729, %v725
    %v1126 = vpack.c.b16 %v730, %v726
    %v1127 = vpack.c.b16 %v735, %v731
    %v1128 = vpack.c.b16 %v736, %v732
    %v1129 = vpack.c.b16 %v737, %v733
    %v1130 = vpack.c.b16 %v738, %v734
    %v1131 = vpack.c.b16 %v743, %v739
    %v1132 = vpack.c.b16 %v744, %v740
    %v1133 = vpack.c.b16 %v745, %v741
    %v1134 = vpack.c.b16 %v746, %v742
    %v1135 = vpack.c.b16 %v751, %v747
    %v1136 = vpack.c.b16 %v752, %v748
    %v1137 = vpack.c.b16 %v753, %v749
    %v1138 = vpack.c.b16 %v754, %v750
    %v1139 = vpack.c.b16 %v759, %v755
    %v1140 = vpack.c.b16 %v760, %v756
    %v1141 = vpack.c.b16 %v761, %v757
    %v1142 = vpack.c.b16 %v762, %v758
    %v1143 = vpack.c.b16 %v767, %v763
    %v1144 = vpack.c.b16 %v768, %v764
    %v1145 = vpack.c.b16 %v769, %v765
    %v1146 = vpack.c.b16 %v770, %v766
    %v1147 = vpack.c.b16 %v775, %v771
    %v1148 = vpack.c.b16 %v776, %v772
    %v1149 = vpack.c.b16 %v777, %v773
    %v1150 = vpack.c.b16 %v778, %v774
    %v1151 = vpack.c.b16 %v783, %v779
    %v1152 = vpack.c.b16 %v784, %v780
    %v1153 = vpack.c.b16 %v785, %v781
    %v1154 = vpack.c.b16 %v786, %v782
    %v1155 = vpack.c.b16 %v791, %v787
    %v1156 = vpack.c.b16 %v792, %v788
    %v1157 = vpack.c.b16 %v793, %v789
    %v1158 = vpack.c.b16 %v794, %v790
    %v1159 = vpack.c.b16 %v799, %v795
    %v1160 = vpack.c.b16 %v800, %v796
    %v1161 = vpack.c.b16 %v801, %v797
    %v1162 = vpack.c.b16 %v802, %v798
    %v1163 = vpack.c.b16 %v807, %v803
    %v1164 = vpack.c.b16 %v808, %v804
    %v1165 = vpack.c.b16 %v809, %v805
    %v1166 = vpack.c.b16 %v810, %v806
    %v1167 = vpack.c.b16 %v815, %v811
    %v1168 = vpack.c.b16 %v816, %v812
    %v1169 = vpack.c.b16 %v817, %v813
    %v1170 = vpack.c.b16 %v818, %v814
    %v1171 = vpack.c.b16 %v823, %v819
    %v1172 = vpack.c.b16 %v824, %v820
    %v1173 = vpack.c.b16 %v825, %v821
    %v1174 = vpack.c.b16 %v826, %v822
    %v1175 = vpack.c.b16 %v831, %v827
    %v1176 = vpack.c.b16 %v832, %v828
    %v1177 = vpack.c.b16 %v833, %v829
    %v1178 = vpack.c.b16 %v834, %v830
    %v1179 = vpack.c.b16 %v839, %v835
    %v1180 = vpack.c.b16 %v840, %v836
    %v1181 = vpack.c.b16 %v841, %v837
    %v1182 = vpack.c.b16 %v842, %v838
    %v1183 = vpack.c.b16 %v847, %v843
    %v1184 = vpack.c.b16 %v848, %v844
    %v1185 = vpack.c.b16 %v849, %v845
    %v1186 = vpack.c.b16 %v850, %v846
    %v1187 = vpack.c.b16 %v855, %v851
    %v1188 = vpack.c.b16 %v856, %v852
    %v1189 = vpack.c.b16 %v857, %v853
    %v1190 = vpack.c.b16 %v858, %v854
    %v1191 = vpack.c.b16 %v863, %v859
    %v1192 = vpack.c.b16 %v864, %v860
    %v1193 = vpack.c.b16 %v865, %v861
    %v1194 = vpack.c.b16 %v866, %v862
    %v1195 = vpack.c.b16 %v871, %v867
    %v1196 = vpack.c.b16 %v872, %v868
    %v1197 = vpack.c.b16 %v873, %v869
    %v1198 = vpack.c.b16 %v874, %v870
    %v1199 = vpack.c.b16 %v879, %v875
    %v1200 = vpack.c.b16 %v880, %v876
    %v1201 = vpack.c.b16 %v881, %v877
    %v1202 = vpack.c.b16 %v882, %v878
    %v1203 = vpack.c.b16 %v887, %v883
    %v1204 = vpack.c.b16 %v888, %v884
    %v1205 = vpack.c.b16 %v889, %v885
    %v1206 = vpack.c.b16 %v890, %v886
    %v1207 = vpack.c.b16 %v895, %v891
    %v1208 = vpack.c.b16 %v896, %v892
    %v1209 = vpack.c.b16 %v897, %v893
    %v1210 = vpack.c.b16 %v898, %v894
    %v1211 = vpack.c.b16 %v903, %v899
    %v1212 = vpack.c.b16 %v904, %v900
    %v1213 = vpack.c.b16 %v905, %v901
    %v1214 = vpack.c.b16 %v906, %v902
    %v1215 = vpack.c.b16 %v911, %v907
    %v1216 = vpack.c.b16 %v912, %v908
    %v1217 = vpack.c.b16 %v913, %v909
    %v1218 = vpack.c.b16 %v914, %v910
    %v1219 = vpack.c.b16 %v919, %v915
    %v1220 = vpack.c.b16 %v920, %v916
    %v1221 = vpack.c.b16 %v921, %v917
    %v1222 = vpack.c.b16 %v922, %v918
    %v1223 = vpack.c.b16 %v927, %v923
    %v1224 = vpack.c.b16 %v928, %v924
    %v1225 = vpack.c.b16 %v929, %v925
    %v1226 = vpack.c.b16 %v930, %v926
    %v1227 = vpack.c.b16 %v935, %v931
    %v1228 = vpack.c.b16 %v936, %v932
    %v1229 = vpack.c.b16 %v937, %v933
    %v1230 = vpack.c.b16 %v938, %v934
    %v1231 = vpack.c.b16 %v943, %v939
    %v1232 = vpack.c.b16 %v944, %v940
    %v1233 = vpack.c.b16 %v945, %v941
    %v1234 = vpack.c.b16 %v946, %v942
    %v1235 = vpack.c.b16 %v951, %v947
    %v1236 = vpack.c.b16 %v952, %v948
    %v1237 = vpack.c.b16 %v953, %v949
    %v1238 = vpack.c.b16 %v954, %v950
    %v1239 = vpack.c.b16 %v959, %v955
    %v1240 = vpack.c.b16 %v960, %v956
    %v1241 = vpack.c.b16 %v961, %v957
    %v1242 = vpack.c.b16 %v962, %v958
    %v1243 = vpack.c.b16 %v967, %v963
    %v1244 = vpack.c.b16 %v968, %v964
    %v1245 = vpack.c.b16 %v969, %v965
    %v1246 = vpack.c.b16 %v970, %v966
    %v1247 = vpack.c.b16 %v975, %v971
    %v1248 = vpack.c.b16 %v976, %v972
    %v1249 = vpack.c.b16 %v977, %v973
    %v1250 = vpack.c.b16 %v978, %v974
    %v1251 = vpack.c.b16 %v983, %v979
    %v1252 = vpack.c.b16 %v984, %v980
    %v1253 = vpack.c.b16 %v985, %v981
    %v1254 = vpack.c.b16 %v986, %v982
    %v1255 = vpack.c.b16 %v991, %v987
    %v1256 = vpack.c.b16 %v992, %v988
    %v1257 = vpack.c.b16 %v993, %v989
    %v1258 = vpack.c.b16 %v994, %v990
    %v1259 = vpack.c.b16 %v999, %v995
    %v1260 = vpack.c.b16 %v1000, %v996
    %v1261 = vpack.c.b16 %v1001, %v997
    %v1262 = vpack.c.b16 %v1002, %v998
    %v1263 = vpack.c.b16 %v1007, %v1003
    %v1264 = vpack.c.b16 %v1008, %v1004
    %v1265 = vpack.c.b16 %v1009, %v1005
    %v1266 = vpack.c.b16 %v1010, %v1006
    %v1267 = vpack.c.b16 %v1015, %v1011
    %v1268 = vpack.c.b16 %v1016, %v1012
    %v1269 = vpack.c.b16 %v1017, %v1013
    %v1270 = vpack.c.b16 %v1018, %v1014
    %v1271 = vpack.c.b16 %v1023, %v1019
    %v1272 = vpack.c.b16 %v1024, %v1020
    %v1273 = vpack.c.b16 %v1025, %v1021
    %v1274 = vpack.c.b16 %v1026, %v1022
    %v1275 = vpack.c.b16 %v1031, %v1027
    %v1276 = vpack.c.b16 %v1032, %v1028
    %v1277 = vpack.c.b16 %v1033, %v1029
    %v1278 = vpack.c.b16 %v1034, %v1030
    %v1279 = vpack.c.b16 %v1039, %v1035
    %v1280 = vpack.c.b16 %v1040, %v1036
    %v1281 = vpack.c.b16 %v1041, %v1037
    %v1282 = vpack.c.b16 %v1042, %v1038
    %v1283 = vpack.c.b16 %v1047, %v1043
    %v1284 = vpack.c.b16 %v1048, %v1044
    %v1285 = vpack.c.b16 %v1049, %v1045
    %v1286 = vpack.c.b16 %v1050, %v1046
    %v1287 = vpack.c.b16 %v1055, %v1051
    %v1288 = vpack.c.b16 %v1056, %v1052
    %v1289 = vpack.c.b16 %v1057, %v1053
    %v1290 = vpack.c.b16 %v1058, %v1054
    %v1291 = vpack.c.b16 %v1063, %v1059
    %v1292 = vpack.c.b16 %v1064, %v1060
    %v1293 = vpack.c.b16 %v1065, %v1061
    %v1294 = vpack.c.b16 %v1066, %v1062
    %v1295 = vpack.c.b16 %v1071, %v1067
    %v1296 = vpack.c.b16 %v1072, %v1068
    %v1297 = vpack.c.b16 %v1073, %v1069
    %v1298 = vpack.c.b16 %v1074, %v1070
    %1523 = vmatpush.bf16.msra.mxu0 %v1103
    %1524 = vmatpush.bf16.msra.mxu0 %v1099
    %1525 = vmatpush.bf16.msra.mxu0 %v1095
    %1526 = vmatpush.bf16.msra.mxu0 %v1091
    %1527 = vmatpush.bf16.msra.mxu0 %v1087
    %1528 = vmatpush.bf16.msra.mxu0 %v1083
    %1529 = vmatpush.bf16.msra.mxu0 %v1079
    %1530 = vmatpush.bf16.msra.mxu0 %v1075
    %1531 = vmatmul.bf16.gmra.mxu0 %v389
    %v1532 = vpop.f32.mrf.mxu0
    %v1533 = vadd.f32 %v359, %v1532
    %v1534 = vpop.f32.mrf.mxu0
    %v1535 = vadd.f32 %v359, %v1534
    %1536 = vdwg.mxu0
    %1537 = vmatpush.bf16.msra.mxu0 %v1135
    %1538 = vmatpush.bf16.msra.mxu0 %v1131
    %1539 = vmatpush.bf16.msra.mxu0 %v1127
    %1540 = vmatpush.bf16.msra.mxu0 %v1123
    %1541 = vmatpush.bf16.msra.mxu0 %v1119
    %1542 = vmatpush.bf16.msra.mxu0 %v1115
    %1543 = vmatpush.bf16.msra.mxu0 %v1111
    %1544 = vmatpush.bf16.msra.mxu0 %v1107
    %1545 = vmatmul.bf16.gmra.mxu0 %v390
    %v1546 = vpop.f32.mrf.mxu0
    %v1547 = vadd.f32 %v1533, %v1546
    %v1548 = vpop.f32.mrf.mxu0
    %v1549 = vadd.f32 %v1535, %v1548
    %1550 = vdwg.mxu0
    %1551 = vmatpush.bf16.msra.mxu0 %v1167
    %1552 = vmatpush.bf16.msra.mxu0 %v1163
    %1553 = vmatpush.bf16.msra.mxu0 %v1159
    %1554 = vmatpush.bf16.msra.mxu0 %v1155
    %1555 = vmatpush.bf16.msra.mxu0 %v1151
    %1556 = vmatpush.bf16.msra.mxu0 %v1147
    %1557 = vmatpush.bf16.msra.mxu0 %v1143
    %1558 = vmatpush.bf16.msra.mxu0 %v1139
    %1559 = vmatmul.bf16.gmra.mxu0 %v391
    %v1560 = vpop.f32.mrf.mxu0
    %v1561 = vadd.f32 %v1547, %v1560
    %v1562 = vpop.f32.mrf.mxu0
    %v1563 = vadd.f32 %v1549, %v1562
    %1564 = vdwg.mxu0
    %1565 = vmatpush.bf16.msra.mxu0 %v1199
    %1566 = vmatpush.bf16.msra.mxu0 %v1195
    %1567 = vmatpush.bf16.msra.mxu0 %v1191
    %1568 = vmatpush.bf16.msra.mxu0 %v1187
    %1569 = vmatpush.bf16.msra.mxu0 %v1183
    %1570 = vmatpush.bf16.msra.mxu0 %v1179
    %1571 = vmatpush.bf16.msra.mxu0 %v1175
    %1572 = vmatpush.bf16.msra.mxu0 %v1171
    %1573 = vmatmul.bf16.gmra.mxu0 %v392
    %v1574 = vpop.f32.mrf.mxu0
    %v1575 = vadd.f32 %v1561, %v1574
    %v1576 = vpop.f32.mrf.mxu0
    %v1577 = vadd.f32 %v1563, %v1576
    %1578 = vdwg.mxu0
    %1579 = vmatpush.bf16.msra.mxu0 %v1231
    %1580 = vmatpush.bf16.msra.mxu0 %v1227
    %1581 = vmatpush.bf16.msra.mxu0 %v1223
    %1582 = vmatpush.bf16.msra.mxu0 %v1219
    %1583 = vmatpush.bf16.msra.mxu0 %v1215
    %1584 = vmatpush.bf16.msra.mxu0 %v1211
    %1585 = vmatpush.bf16.msra.mxu0 %v1207
    %1586 = vmatpush.bf16.msra.mxu0 %v1203
    %1587 = vmatmul.bf16.gmra.mxu0 %v393
    %v1588 = vpop.f32.mrf.mxu0
    %v1589 = vadd.f32 %v1575, %v1588
    %v1590 = vpop.f32.mrf.mxu0
    %v1591 = vadd.f32 %v1577, %v1590
    %1592 = vdwg.mxu0
    %1593 = vmatpush.bf16.msra.mxu0 %v1263
    %1594 = vmatpush.bf16.msra.mxu0 %v1259
    %1595 = vmatpush.bf16.msra.mxu0 %v1255
    %1596 = vmatpush.bf16.msra.mxu0 %v1251
    %1597 = vmatpush.bf16.msra.mxu0 %v1247
    %1598 = vmatpush.bf16.msra.mxu0 %v1243
    %1599 = vmatpush.bf16.msra.mxu0 %v1239
    %1600 = vmatpush.bf16.msra.mxu0 %v1235
    %1601 = vmatmul.bf16.gmra.mxu0 %v394
    %v1602 = vpop.f32.mrf.mxu0
    %v1603 = vadd.f32 %v1589, %v1602
    %v1604 = vpop.f32.mrf.mxu0
    %v1605 = vadd.f32 %v1591, %v1604
    %1606 = vdwg.mxu0
    %1607 = vmatpush.bf16.msra.mxu0 %v1295
    %1608 = vmatpush.bf16.msra.mxu0 %v1291
    %1609 = vmatpush.bf16.msra.mxu0 %v1287
    %1610 = vmatpush.bf16.msra.mxu0 %v1283
    %1611 = vmatpush.bf16.msra.mxu0 %v1279
    %1612 = vmatpush.bf16.msra.mxu0 %v1275
    %1613 = vmatpush.bf16.msra.mxu0 %v1271
    %1614 = vmatpush.bf16.msra.mxu0 %v1267
    %1615 = vmatmul.bf16.gmra.mxu0 %v395
    %v1616 = vpop.f32.mrf.mxu0
    %v1617 = vadd.f32 %v1603, %v1616
    %v1618 = vpop.f32.mrf.mxu0
    %v1619 = vadd.f32 %v1605, %v1618
    %1620 = vdwg.mxu0
    %1621 = vmatpush.bf16.msra.mxu0 %v1104
    %1622 = vmatpush.bf16.msra.mxu0 %v1100
    %1623 = vmatpush.bf16.msra.mxu0 %v1096
    %1624 = vmatpush.bf16.msra.mxu0 %v1092
    %1625 = vmatpush.bf16.msra.mxu0 %v1088
    %1626 = vmatpush.bf16.msra.mxu0 %v1084
    %1627 = vmatpush.bf16.msra.mxu0 %v1080
    %1628 = vmatpush.bf16.msra.mxu0 %v1076
    %1629 = vmatmul.bf16.gmra.mxu0 %v389
    %v1630 = vpop.f32.mrf.mxu0
    %v1631 = vadd.f32 %v360, %v1630
    %v1632 = vpop.f32.mrf.mxu0
    %v1633 = vadd.f32 %v360, %v1632
    %1634 = vdwg.mxu0
    %1635 = vmatpush.bf16.msra.mxu0 %v1136
    %1636 = vmatpush.bf16.msra.mxu0 %v1132
    %1637 = vmatpush.bf16.msra.mxu0 %v1128
    %1638 = vmatpush.bf16.msra.mxu0 %v1124
    %1639 = vmatpush.bf16.msra.mxu0 %v1120
    %1640 = vmatpush.bf16.msra.mxu0 %v1116
    %1641 = vmatpush.bf16.msra.mxu0 %v1112
    %1642 = vmatpush.bf16.msra.mxu0 %v1108
    %1643 = vmatmul.bf16.gmra.mxu0 %v390
    %v1644 = vpop.f32.mrf.mxu0
    %v1645 = vadd.f32 %v1631, %v1644
    %v1646 = vpop.f32.mrf.mxu0
    %v1647 = vadd.f32 %v1633, %v1646
    %1648 = vdwg.mxu0
    %1649 = vmatpush.bf16.msra.mxu0 %v1168
    %1650 = vmatpush.bf16.msra.mxu0 %v1164
    %1651 = vmatpush.bf16.msra.mxu0 %v1160
    %1652 = vmatpush.bf16.msra.mxu0 %v1156
    %1653 = vmatpush.bf16.msra.mxu0 %v1152
    %1654 = vmatpush.bf16.msra.mxu0 %v1148
    %1655 = vmatpush.bf16.msra.mxu0 %v1144
    %1656 = vmatpush.bf16.msra.mxu0 %v1140
    %1657 = vmatmul.bf16.gmra.mxu0 %v391
    %v1658 = vpop.f32.mrf.mxu0
    %v1659 = vadd.f32 %v1645, %v1658
    %v1660 = vpop.f32.mrf.mxu0
    %v1661 = vadd.f32 %v1647, %v1660
    %1662 = vdwg.mxu0
    %1663 = vmatpush.bf16.msra.mxu0 %v1200
    %1664 = vmatpush.bf16.msra.mxu0 %v1196
    %1665 = vmatpush.bf16.msra.mxu0 %v1192
    %1666 = vmatpush.bf16.msra.mxu0 %v1188
    %1667 = vmatpush.bf16.msra.mxu0 %v1184
    %1668 = vmatpush.bf16.msra.mxu0 %v1180
    %1669 = vmatpush.bf16.msra.mxu0 %v1176
    %1670 = vmatpush.bf16.msra.mxu0 %v1172
    %1671 = vmatmul.bf16.gmra.mxu0 %v392
    %v1672 = vpop.f32.mrf.mxu0
    %v1673 = vadd.f32 %v1659, %v1672
    %v1674 = vpop.f32.mrf.mxu0
    %v1675 = vadd.f32 %v1661, %v1674
    %1676 = vdwg.mxu0
    %1677 = vmatpush.bf16.msra.mxu0 %v1232
    %1678 = vmatpush.bf16.msra.mxu0 %v1228
    %1679 = vmatpush.bf16.msra.mxu0 %v1224
    %1680 = vmatpush.bf16.msra.mxu0 %v1220
    %1681 = vmatpush.bf16.msra.mxu0 %v1216
    %1682 = vmatpush.bf16.msra.mxu0 %v1212
    %1683 = vmatpush.bf16.msra.mxu0 %v1208
    %1684 = vmatpush.bf16.msra.mxu0 %v1204
    %1685 = vmatmul.bf16.gmra.mxu0 %v393
    %v1686 = vpop.f32.mrf.mxu0
    %v1687 = vadd.f32 %v1673, %v1686
    %v1688 = vpop.f32.mrf.mxu0
    %v1689 = vadd.f32 %v1675, %v1688
    %1690 = vdwg.mxu0
    %1691 = vmatpush.bf16.msra.mxu0 %v1264
    %1692 = vmatpush.bf16.msra.mxu0 %v1260
    %1693 = vmatpush.bf16.msra.mxu0 %v1256
    %1694 = vmatpush.bf16.msra.mxu0 %v1252
    %1695 = vmatpush.bf16.msra.mxu0 %v1248
    %1696 = vmatpush.bf16.msra.mxu0 %v1244
    %1697 = vmatpush.bf16.msra.mxu0 %v1240
    %1698 = vmatpush.bf16.msra.mxu0 %v1236
    %1699 = vmatmul.bf16.gmra.mxu0 %v394
    %v1700 = vpop.f32.mrf.mxu0
    %v1701 = vadd.f32 %v1687, %v1700
    %v1702 = vpop.f32.mrf.mxu0
    %v1703 = vadd.f32 %v1689, %v1702
    %1704 = vdwg.mxu0
    %1705 = vmatpush.bf16.msra.mxu0 %v1296
    %1706 = vmatpush.bf16.msra.mxu0 %v1292
    %1707 = vmatpush.bf16.msra.mxu0 %v1288
    %1708 = vmatpush.bf16.msra.mxu0 %v1284
    %1709 = vmatpush.bf16.msra.mxu0 %v1280
    %1710 = vmatpush.bf16.msra.mxu0 %v1276
    %1711 = vmatpush.bf16.msra.mxu0 %v1272
    %1712 = vmatpush.bf16.msra.mxu0 %v1268
    %1713 = vmatmul.bf16.gmra.mxu0 %v395
    %v1714 = vpop.f32.mrf.mxu0
    %v1715 = vadd.f32 %v1701, %v1714
    %v1716 = vpop.f32.mrf.mxu0
    %v1717 = vadd.f32 %v1703, %v1716
    %1718 = vdwg.mxu0
    %1719 = vmatpush.bf16.msra.mxu0 %v1105
    %1720 = vmatpush.bf16.msra.mxu0 %v1101
    %1721 = vmatpush.bf16.msra.mxu0 %v1097
    %1722 = vmatpush.bf16.msra.mxu0 %v1093
    %1723 = vmatpush.bf16.msra.mxu0 %v1089
    %1724 = vmatpush.bf16.msra.mxu0 %v1085
    %1725 = vmatpush.bf16.msra.mxu0 %v1081
    %1726 = vmatpush.bf16.msra.mxu0 %v1077
    %1727 = vmatmul.bf16.gmra.mxu0 %v389
    %v1728 = vpop.f32.mrf.mxu0
    %v1729 = vadd.f32 %v361, %v1728
    %v1730 = vpop.f32.mrf.mxu0
    %v1731 = vadd.f32 %v361, %v1730
    %1732 = vdwg.mxu0
    %1733 = vmatpush.bf16.msra.mxu0 %v1137
    %1734 = vmatpush.bf16.msra.mxu0 %v1133
    %1735 = vmatpush.bf16.msra.mxu0 %v1129
    %1736 = vmatpush.bf16.msra.mxu0 %v1125
    %1737 = vmatpush.bf16.msra.mxu0 %v1121
    %1738 = vmatpush.bf16.msra.mxu0 %v1117
    %1739 = vmatpush.bf16.msra.mxu0 %v1113
    %1740 = vmatpush.bf16.msra.mxu0 %v1109
    %1741 = vmatmul.bf16.gmra.mxu0 %v390
    %v1742 = vpop.f32.mrf.mxu0
    %v1743 = vadd.f32 %v1729, %v1742
    %v1744 = vpop.f32.mrf.mxu0
    %v1745 = vadd.f32 %v1731, %v1744
    %1746 = vdwg.mxu0
    %1747 = vmatpush.bf16.msra.mxu0 %v1169
    %1748 = vmatpush.bf16.msra.mxu0 %v1165
    %1749 = vmatpush.bf16.msra.mxu0 %v1161
    %1750 = vmatpush.bf16.msra.mxu0 %v1157
    %1751 = vmatpush.bf16.msra.mxu0 %v1153
    %1752 = vmatpush.bf16.msra.mxu0 %v1149
    %1753 = vmatpush.bf16.msra.mxu0 %v1145
    %1754 = vmatpush.bf16.msra.mxu0 %v1141
    %1755 = vmatmul.bf16.gmra.mxu0 %v391
    %v1756 = vpop.f32.mrf.mxu0
    %v1757 = vadd.f32 %v1743, %v1756
    %v1758 = vpop.f32.mrf.mxu0
    %v1759 = vadd.f32 %v1745, %v1758
    %1760 = vdwg.mxu0
    %1761 = vmatpush.bf16.msra.mxu0 %v1201
    %1762 = vmatpush.bf16.msra.mxu0 %v1197
    %1763 = vmatpush.bf16.msra.mxu0 %v1193
    %1764 = vmatpush.bf16.msra.mxu0 %v1189
    %1765 = vmatpush.bf16.msra.mxu0 %v1185
    %1766 = vmatpush.bf16.msra.mxu0 %v1181
    %1767 = vmatpush.bf16.msra.mxu0 %v1177
    %1768 = vmatpush.bf16.msra.mxu0 %v1173
    %1769 = vmatmul.bf16.gmra.mxu0 %v392
    %v1770 = vpop.f32.mrf.mxu0
    %v1771 = vadd.f32 %v1757, %v1770
    %v1772 = vpop.f32.mrf.mxu0
    %v1773 = vadd.f32 %v1759, %v1772
    %1774 = vdwg.mxu0
    %1775 = vmatpush.bf16.msra.mxu0 %v1233
    %1776 = vmatpush.bf16.msra.mxu0 %v1229
    %1777 = vmatpush.bf16.msra.mxu0 %v1225
    %1778 = vmatpush.bf16.msra.mxu0 %v1221
    %1779 = vmatpush.bf16.msra.mxu0 %v1217
    %1780 = vmatpush.bf16.msra.mxu0 %v1213
    %1781 = vmatpush.bf16.msra.mxu0 %v1209
    %1782 = vmatpush.bf16.msra.mxu0 %v1205
    %1783 = vmatmul.bf16.gmra.mxu0 %v393
    %v1784 = vpop.f32.mrf.mxu0
    %v1785 = vadd.f32 %v1771, %v1784
    %v1786 = vpop.f32.mrf.mxu0
    %v1787 = vadd.f32 %v1773, %v1786
    %1788 = vdwg.mxu0
    %1789 = vmatpush.bf16.msra.mxu0 %v1265
    %1790 = vmatpush.bf16.msra.mxu0 %v1261
    %1791 = vmatpush.bf16.msra.mxu0 %v1257
    %1792 = vmatpush.bf16.msra.mxu0 %v1253
    %1793 = vmatpush.bf16.msra.mxu0 %v1249
    %1794 = vmatpush.bf16.msra.mxu0 %v1245
    %1795 = vmatpush.bf16.msra.mxu0 %v1241
    %1796 = vmatpush.bf16.msra.mxu0 %v1237
    %1797 = vmatmul.bf16.gmra.mxu0 %v394
    %v1798 = vpop.f32.mrf.mxu0
    %v1799 = vadd.f32 %v1785, %v1798
    %v1800 = vpop.f32.mrf.mxu0
    %v1801 = vadd.f32 %v1787, %v1800
    %1802 = vdwg.mxu0
    %1803 = vmatpush.bf16.msra.mxu0 %v1297
    %1804 = vmatpush.bf16.msra.mxu0 %v1293
    %1805 = vmatpush.bf16.msra.mxu0 %v1289
    %1806 = vmatpush.bf16.msra.mxu0 %v1285
    %1807 = vmatpush.bf16.msra.mxu0 %v1281
    %1808 = vmatpush.bf16.msra.mxu0 %v1277
    %1809 = vmatpush.bf16.msra.mxu0 %v1273
    %1810 = vmatpush.bf16.msra.mxu0 %v1269
    %1811 = vmatmul.bf16.gmra.mxu0 %v395
    %v1812 = vpop.f32.mrf.mxu0
    %v1813 = vadd.f32 %v1799, %v1812
    %v1814 = vpop.f32.mrf.mxu0
    %v1815 = vadd.f32 %v1801, %v1814
    %1816 = vdwg.mxu0
    %1817 = vmatpush.bf16.msra.mxu0 %v1106
    %1818 = vmatpush.bf16.msra.mxu0 %v1102
    %1819 = vmatpush.bf16.msra.mxu0 %v1098
    %1820 = vmatpush.bf16.msra.mxu0 %v1094
    %1821 = vmatpush.bf16.msra.mxu0 %v1090
    %1822 = vmatpush.bf16.msra.mxu0 %v1086
    %1823 = vmatpush.bf16.msra.mxu0 %v1082
    %1824 = vmatpush.bf16.msra.mxu0 %v1078
    %1825 = vmatmul.bf16.gmra.mxu0 %v389
    %v1826 = vpop.f32.mrf.mxu0
    %v1827 = vadd.f32 %v362, %v1826
    %v1828 = vpop.f32.mrf.mxu0
    %v1829 = vadd.f32 %v362, %v1828
    %1830 = vdwg.mxu0
    %1831 = vmatpush.bf16.msra.mxu0 %v1138
    %1832 = vmatpush.bf16.msra.mxu0 %v1134
    %1833 = vmatpush.bf16.msra.mxu0 %v1130
    %1834 = vmatpush.bf16.msra.mxu0 %v1126
    %1835 = vmatpush.bf16.msra.mxu0 %v1122
    %1836 = vmatpush.bf16.msra.mxu0 %v1118
    %1837 = vmatpush.bf16.msra.mxu0 %v1114
    %1838 = vmatpush.bf16.msra.mxu0 %v1110
    %1839 = vmatmul.bf16.gmra.mxu0 %v390
    %v1840 = vpop.f32.mrf.mxu0
    %v1841 = vadd.f32 %v1827, %v1840
    %v1842 = vpop.f32.mrf.mxu0
    %v1843 = vadd.f32 %v1829, %v1842
    %1844 = vdwg.mxu0
    %1845 = vmatpush.bf16.msra.mxu0 %v1170
    %1846 = vmatpush.bf16.msra.mxu0 %v1166
    %1847 = vmatpush.bf16.msra.mxu0 %v1162
    %1848 = vmatpush.bf16.msra.mxu0 %v1158
    %1849 = vmatpush.bf16.msra.mxu0 %v1154
    %1850 = vmatpush.bf16.msra.mxu0 %v1150
    %1851 = vmatpush.bf16.msra.mxu0 %v1146
    %1852 = vmatpush.bf16.msra.mxu0 %v1142
    %1853 = vmatmul.bf16.gmra.mxu0 %v391
    %v1854 = vpop.f32.mrf.mxu0
    %v1855 = vadd.f32 %v1841, %v1854
    %v1856 = vpop.f32.mrf.mxu0
    %v1857 = vadd.f32 %v1843, %v1856
    %1858 = vdwg.mxu0
    %1859 = vmatpush.bf16.msra.mxu0 %v1202
    %1860 = vmatpush.bf16.msra.mxu0 %v1198
    %1861 = vmatpush.bf16.msra.mxu0 %v1194
    %1862 = vmatpush.bf16.msra.mxu0 %v1190
    %1863 = vmatpush.bf16.msra.mxu0 %v1186
    %1864 = vmatpush.bf16.msra.mxu0 %v1182
    %1865 = vmatpush.bf16.msra.mxu0 %v1178
    %1866 = vmatpush.bf16.msra.mxu0 %v1174
    %1867 = vmatmul.bf16.gmra.mxu0 %v392
    %v1868 = vpop.f32.mrf.mxu0
    %v1869 = vadd.f32 %v1855, %v1868
    %v1870 = vpop.f32.mrf.mxu0
    %v1871 = vadd.f32 %v1857, %v1870
    %1872 = vdwg.mxu0
    %1873 = vmatpush.bf16.msra.mxu0 %v1234
    %1874 = vmatpush.bf16.msra.mxu0 %v1230
    %1875 = vmatpush.bf16.msra.mxu0 %v1226
    %1876 = vmatpush.bf16.msra.mxu0 %v1222
    %1877 = vmatpush.bf16.msra.mxu0 %v1218
    %1878 = vmatpush.bf16.msra.mxu0 %v1214
    %1879 = vmatpush.bf16.msra.mxu0 %v1210
    %1880 = vmatpush.bf16.msra.mxu0 %v1206
    %1881 = vmatmul.bf16.gmra.mxu0 %v393
    %v1882 = vpop.f32.mrf.mxu0
    %v1883 = vadd.f32 %v1869, %v1882
    %v1884 = vpop.f32.mrf.mxu0
    %v1885 = vadd.f32 %v1871, %v1884
    %1886 = vdwg.mxu0
    %1887 = vmatpush.bf16.msra.mxu0 %v1266
    %1888 = vmatpush.bf16.msra.mxu0 %v1262
    %1889 = vmatpush.bf16.msra.mxu0 %v1258
    %1890 = vmatpush.bf16.msra.mxu0 %v1254
    %1891 = vmatpush.bf16.msra.mxu0 %v1250
    %1892 = vmatpush.bf16.msra.mxu0 %v1246
    %1893 = vmatpush.bf16.msra.mxu0 %v1242
    %1894 = vmatpush.bf16.msra.mxu0 %v1238
    %1895 = vmatmul.bf16.gmra.mxu0 %v394
    %v1896 = vpop.f32.mrf.mxu0
    %v1897 = vadd.f32 %v1883, %v1896
    %v1898 = vpop.f32.mrf.mxu0
    %v1899 = vadd.f32 %v1885, %v1898
    %1900 = vdwg.mxu0
    %1901 = vmatpush.bf16.msra.mxu0 %v1298
    %1902 = vmatpush.bf16.msra.mxu0 %v1294
    %1903 = vmatpush.bf16.msra.mxu0 %v1290
    %1904 = vmatpush.bf16.msra.mxu0 %v1286
    %1905 = vmatpush.bf16.msra.mxu0 %v1282
    %1906 = vmatpush.bf16.msra.mxu0 %v1278
    %1907 = vmatpush.bf16.msra.mxu0 %v1274
    %1908 = vmatpush.bf16.msra.mxu0 %v1270
    %1909 = vmatmul.bf16.gmra.mxu0 %v395
    %v1910 = vpop.f32.mrf.mxu0
    %v1911 = vadd.f32 %v1897, %v1910
    %v1912 = vpop.f32.mrf.mxu0
    %v1913 = vadd.f32 %v1899, %v1912
    %1914 = vdwg.mxu0
    %v1915 = vmax.f32 %v1617, 0.0
    %v1916 = vmax.f32 %v1715, 0.0
    %v1917 = vmax.f32 %v1813, 0.0
    %v1918 = vmax.f32 %v1911, 0.0
    %v1919 = vmax.f32 %v1619, 0.0
    %v1920 = vmax.f32 %v1717, 0.0
    %v1921 = vmax.f32 %v1815, 0.0
    %v1922 = vmax.f32 %v1913, 0.0
    %v1923 = vpack.c.bf16 %v1919, %v1915
    %v1924 = vpack.c.bf16 %v1920, %v1916
    %v1925 = vpack.c.bf16 %v1921, %v1917
    %v1926 = vpack.c.bf16 %v1922, %v1918
    %v1927 = vld [vmem:[#allocation8] sm:$0xff]
    %v1928 = vld [vmem:[#allocation8 + $0x8] sm:$0xf]
    %v1929 = vld [vmem:[#allocation8 + $0xc] sm:$0xff]
    %v1930 = vld [vmem:[#allocation8 + $0x14] sm:$0xf]
    %v1931 = vld [vmem:[#allocation8 + $0x18] sm:$0xff]
    %v1932 = vld [vmem:[#allocation8 + $0x20] sm:$0xf]
    %v1933 = vld [vmem:[#allocation8 + $0x24] sm:$0xff]
    %v1934 = vld [vmem:[#allocation8 + $0x2c] sm:$0xf]
    %v1935 = vld [vmem:[#allocation8 + $0x30] sm:$0xff]
    %v1936 = vld [vmem:[#allocation8 + $0x38] sm:$0xf]
    %v1937 = vld [vmem:[#allocation8 + $0x3c] sm:$0xff]
    %v1938 = vld [vmem:[#allocation8 + $0x44] sm:$0xf]
    %v1939 = vld [vmem:[#allocation8 + $0x48] sm:$0xff]
    %v1940 = vld [vmem:[#allocation8 + $0x50] sm:$0xf]
    %v1941 = vld [vmem:[#allocation8 + $0x54] sm:$0xff]
    %v1942 = vld [vmem:[#allocation8 + $0x5c] sm:$0xf]
    %v1943 = vld [vmem:[#allocation8 + $0x60] sm:$0xff]
    %v1944 = vld [vmem:[#allocation8 + $0x68] sm:$0xf]
    %v1945 = vld [vmem:[#allocation8 + $0x6c] sm:$0xff]
    %v1946 = vld [vmem:[#allocation8 + $0x74] sm:$0xf]
    %v1947 = vld [vmem:[#allocation8 + $0x78] sm:$0xff]
    %v1948 = vld [vmem:[#allocation8 + $0x80] sm:$0xf]
    %v1949 = vld [vmem:[#allocation8 + $0x84] sm:$0xff]
    %v1950 = vld [vmem:[#allocation8 + $0x8c] sm:$0xf]
    %v1951 = vld [vmem:[#allocation8 + $0x90] sm:$0xff]
    %v1952 = vld [vmem:[#allocation8 + $0x98] sm:$0xf]
    %v1953 = vld [vmem:[#allocation8 + $0x9c] sm:$0xff]
    %v1954 = vld [vmem:[#allocation8 + $0xa4] sm:$0xf]
    %v1955 = vld [vmem:[#allocation8 + $0xa8] sm:$0xff]
    %v1956 = vld [vmem:[#allocation8 + $0xb0] sm:$0xf]
    %v1957 = vld [vmem:[#allocation8 + $0xb4] sm:$0xff]
    %v1958 = vld [vmem:[#allocation8 + $0xbc] sm:$0xf]
    %v1959 = vld [vmem:[#allocation8 + $0xc0] sm:$0xff]
    %v1960 = vld [vmem:[#allocation8 + $0xc8] sm:$0xf]
    %v1961 = vld [vmem:[#allocation8 + $0xcc] sm:$0xff]
    %v1962 = vld [vmem:[#allocation8 + $0xd4] sm:$0xf]
    %v1963 = vld [vmem:[#allocation8 + $0xd8] sm:$0xff]
    %v1964 = vld [vmem:[#allocation8 + $0xe0] sm:$0xf]
    %v1965 = vld [vmem:[#allocation8 + $0xe4] sm:$0xff]
    %v1966 = vld [vmem:[#allocation8 + $0xec] sm:$0xf]
    %v1967 = vld [vmem:[#allocation8 + $0xf0] sm:$0xff]
    %v1968 = vld [vmem:[#allocation8 + $0xf8] sm:$0xf]
    %v1969 = vld [vmem:[#allocation8 + $0xfc] sm:$0xff]
    %v1970 = vld [vmem:[#allocation8 + $0x104] sm:$0xf]
    %v1971 = vld [vmem:[#allocation8 + $0x108] sm:$0xff]
    %v1972 = vld [vmem:[#allocation8 + $0x110] sm:$0xf]
    %v1973 = vld [vmem:[#allocation8 + $0x114] sm:$0xff]
    %v1974 = vld [vmem:[#allocation8 + $0x11c] sm:$0xf]
    %v1975 = vld [vmem:[#allocation8 + $0x120] sm:$0xff]
    %v1976 = vld [vmem:[#allocation8 + $0x128] sm:$0xf]
    %v1977 = vld [vmem:[#allocation8 + $0x12c] sm:$0xff]
    %v1978 = vld [vmem:[#allocation8 + $0x134] sm:$0xf]
    %v1979 = vld [vmem:[#allocation8 + $0x138] sm:$0xff]
    %v1980 = vld [vmem:[#allocation8 + $0x140] sm:$0xf]
    %v1981 = vld [vmem:[#allocation8 + $0x144] sm:$0xff]
    %v1982 = vld [vmem:[#allocation8 + $0x14c] sm:$0xf]
    %v1983 = vld [vmem:[#allocation8 + $0x150] sm:$0xff]
    %v1984 = vld [vmem:[#allocation8 + $0x158] sm:$0xf]
    %v1985 = vld [vmem:[#allocation8 + $0x15c] sm:$0xff]
    %v1986 = vld [vmem:[#allocation8 + $0x164] sm:$0xf]
    %v1987 = vld [vmem:[#allocation8 + $0x168] sm:$0xff]
    %v1988 = vld [vmem:[#allocation8 + $0x170] sm:$0xf]
    %v1989 = vld [vmem:[#allocation8 + $0x174] sm:$0xff]
    %v1990 = vld [vmem:[#allocation8 + $0x17c] sm:$0xf]
    %v1991 = vld [vmem:[#allocation8 + $0x180] sm:$0xff]
    %v1992 = vld [vmem:[#allocation8 + $0x188] sm:$0xf]
    %v1993 = vld [vmem:[#allocation8 + $0x18c] sm:$0xff]
    %v1994 = vld [vmem:[#allocation8 + $0x194] sm:$0xf]
    %v1995 = vld [vmem:[#allocation8 + $0x198] sm:$0xff]
    %v1996 = vld [vmem:[#allocation8 + $0x1a0] sm:$0xf]
    %v1997 = vld [vmem:[#allocation8 + $0x1a4] sm:$0xff]
    %v1998 = vld [vmem:[#allocation8 + $0x1ac] sm:$0xf]
    %v1999 = vld [vmem:[#allocation8 + $0x1b0] sm:$0xff]
    %v2000 = vld [vmem:[#allocation8 + $0x1b8] sm:$0xf]
    %v2001 = vld [vmem:[#allocation8 + $0x1bc] sm:$0xff]
    %v2002 = vld [vmem:[#allocation8 + $0x1c4] sm:$0xf]
    %v2003 = vld [vmem:[#allocation8 + $0x1c8] sm:$0xff]
    %v2004 = vld [vmem:[#allocation8 + $0x1d0] sm:$0xf]
    %v2005 = vld [vmem:[#allocation8 + $0x1d4] sm:$0xff]
    %v2006 = vld [vmem:[#allocation8 + $0x1dc] sm:$0xf]
    %v2007 = vld [vmem:[#allocation8 + $0x1e0] sm:$0xff]
    %v2008 = vld [vmem:[#allocation8 + $0x1e8] sm:$0xf]
    %v2009 = vld [vmem:[#allocation8 + $0x1ec] sm:$0xff]
    %v2010 = vld [vmem:[#allocation8 + $0x1f4] sm:$0xf]
    %v2011 = vld [vmem:[#allocation8 + $0x1f8] sm:$0xff]
    %v2012 = vld [vmem:[#allocation8 + $0x200] sm:$0xf]
    %v2013 = vld [vmem:[#allocation8 + $0x204] sm:$0xff]
    %v2014 = vld [vmem:[#allocation8 + $0x20c] sm:$0xf]
    %v2015 = vld [vmem:[#allocation8 + $0x210] sm:$0xff]
    %v2016 = vld [vmem:[#allocation8 + $0x218] sm:$0xf]
    %v2017 = vld [vmem:[#allocation8 + $0x21c] sm:$0xff]
    %v2018 = vld [vmem:[#allocation8 + $0x224] sm:$0xf]
    %v2019 = vld [vmem:[#allocation8 + $0x228] sm:$0xff]
    %v2020 = vld [vmem:[#allocation8 + $0x230] sm:$0xf]
    %v2021 = vld [vmem:[#allocation8 + $0x234] sm:$0xff]
    %v2022 = vld [vmem:[#allocation8 + $0x23c] sm:$0xf]
    %v2023 = vld [vmem:[#allocation8 + $0x240] sm:$0xff]
    %v2024 = vld [vmem:[#allocation8 + $0x248] sm:$0xf]
    %v2025 = vld [vmem:[#allocation8 + $0x24c] sm:$0xff]
    %v2026 = vld [vmem:[#allocation8 + $0x254] sm:$0xf]
    %v2027 = vld [vmem:[#allocation8 + $0x258] sm:$0xff]
    %v2028 = vld [vmem:[#allocation8 + $0x260] sm:$0xf]
    %v2029 = vld [vmem:[#allocation8 + $0x264] sm:$0xff]
    %v2030 = vld [vmem:[#allocation8 + $0x26c] sm:$0xf]
    %v2031 = vld [vmem:[#allocation8 + $0x270] sm:$0xff]
    %v2032 = vld [vmem:[#allocation8 + $0x278] sm:$0xf]
    %v2033 = vld [vmem:[#allocation8 + $0x27c] sm:$0xff]
    %v2034 = vld [vmem:[#allocation8 + $0x284] sm:$0xf]
    %v2035 = vld [vmem:[#allocation8 + $0x288] sm:$0xff]
    %v2036 = vld [vmem:[#allocation8 + $0x290] sm:$0xf]
    %v2037 = vld [vmem:[#allocation8 + $0x294] sm:$0xff]
    %v2038 = vld [vmem:[#allocation8 + $0x29c] sm:$0xf]
    %v2039 = vld [vmem:[#allocation8 + $0x2a0] sm:$0xff]
    %v2040 = vld [vmem:[#allocation8 + $0x2a8] sm:$0xf]
    %v2041 = vld [vmem:[#allocation8 + $0x2ac] sm:$0xff]
    %v2042 = vld [vmem:[#allocation8 + $0x2b4] sm:$0xf]
    %v2043 = vld [vmem:[#allocation8 + $0x2b8] sm:$0xff]
    %v2044 = vld [vmem:[#allocation8 + $0x2c0] sm:$0xf]
    %v2045 = vld [vmem:[#allocation8 + $0x2c4] sm:$0xff]
    %v2046 = vld [vmem:[#allocation8 + $0x2cc] sm:$0xf]
    %v2047 = vld [vmem:[#allocation8 + $0x2d0] sm:$0xff]
    %v2048 = vld [vmem:[#allocation8 + $0x2d8] sm:$0xf]
    %v2049 = vld [vmem:[#allocation8 + $0x2dc] sm:$0xff]
    %v2050 = vld [vmem:[#allocation8 + $0x2e4] sm:$0xf]
    %v2051 = vld [vmem:[#allocation8 + $0x2e8] sm:$0xff]
    %v2052 = vld [vmem:[#allocation8 + $0x2f0] sm:$0xf]
    %v2053 = vld [vmem:[#allocation8 + $0x2f4] sm:$0xff]
    %v2054 = vld [vmem:[#allocation8 + $0x2fc] sm:$0xf]
    %v2055 = vld [vmem:[%s4] sm:$0x7]
    %v2057 = vperm.slane %v2055, 0
    %v2058 = vperm.slane %v2055, 1
    %v2059 = vperm.slane %v2055, 2
    %v2191 = vunpack.c.l.b16 %v1927
    %v2192 = vunpack.c.h.b16 %v1927
    %v2193 = vunpack.c.l.b16 %v1928
    %v2194 = vunpack.c.l.b16 %v1929
    %v2195 = vunpack.c.h.b16 %v1929
    %v2196 = vunpack.c.l.b16 %v1930
    %v2197 = vunpack.c.l.b16 %v1931
    %v2198 = vunpack.c.h.b16 %v1931
    %v2199 = vunpack.c.l.b16 %v1932
    %v2200 = vunpack.c.l.b16 %v1933
    %v2201 = vunpack.c.h.b16 %v1933
    %v2202 = vunpack.c.l.b16 %v1934
    %v2203 = vunpack.c.l.b16 %v1935
    %v2204 = vunpack.c.h.b16 %v1935
    %v2205 = vunpack.c.l.b16 %v1936
    %v2206 = vunpack.c.l.b16 %v1937
    %v2207 = vunpack.c.h.b16 %v1937
    %v2208 = vunpack.c.l.b16 %v1938
    %v2209 = vunpack.c.l.b16 %v1939
    %v2210 = vunpack.c.h.b16 %v1939
    %v2211 = vunpack.c.l.b16 %v1940
    %v2212 = vunpack.c.l.b16 %v1941
    %v2213 = vunpack.c.h.b16 %v1941
    %v2214 = vunpack.c.l.b16 %v1942
    %v2215 = vunpack.c.l.b16 %v1943
    %v2216 = vunpack.c.h.b16 %v1943
    %v2217 = vunpack.c.l.b16 %v1944
    %v2218 = vunpack.c.l.b16 %v1945
    %v2219 = vunpack.c.h.b16 %v1945
    %v2220 = vunpack.c.l.b16 %v1946
    %v2221 = vunpack.c.l.b16 %v1947
    %v2222 = vunpack.c.h.b16 %v1947
    %v2223 = vunpack.c.l.b16 %v1948
    %v2224 = vunpack.c.l.b16 %v1949
    %v2225 = vunpack.c.h.b16 %v1949
    %v2226 = vunpack.c.l.b16 %v1950
    %v2227 = vunpack.c.l.b16 %v1951
    %v2228 = vunpack.c.h.b16 %v1951
    %v2229 = vunpack.c.l.b16 %v1952
    %v2230 = vunpack.c.l.b16 %v1953
    %v2231 = vunpack.c.h.b16 %v1953
    %v2232 = vunpack.c.l.b16 %v1954
    %v2233 = vunpack.c.l.b16 %v1955
    %v2234 = vunpack.c.h.b16 %v1955
    %v2235 = vunpack.c.l.b16 %v1956
    %v2236 = vunpack.c.l.b16 %v1957
    %v2237 = vunpack.c.h.b16 %v1957
    %v2238 = vunpack.c.l.b16 %v1958
    %v2239 = vunpack.c.l.b16 %v1959
    %v2240 = vunpack.c.h.b16 %v1959
    %v2241 = vunpack.c.l.b16 %v1960
    %v2242 = vunpack.c.l.b16 %v1961
    %v2243 = vunpack.c.h.b16 %v1961
    %v2244 = vunpack.c.l.b16 %v1962
    %v2245 = vunpack.c.l.b16 %v1963
    %v2246 = vunpack.c.h.b16 %v1963
    %v2247 = vunpack.c.l.b16 %v1964
    %v2248 = vunpack.c.l.b16 %v1965
    %v2249 = vunpack.c.h.b16 %v1965
    %v2250 = vunpack.c.l.b16 %v1966
    %v2251 = vunpack.c.l.b16 %v1967
    %v2252 = vunpack.c.h.b16 %v1967
    %v2253 = vunpack.c.l.b16 %v1968
    %v2254 = vunpack.c.l.b16 %v1969
    %v2255 = vunpack.c.h.b16 %v1969
    %v2256 = vunpack.c.l.b16 %v1970
    %v2257 = vunpack.c.l.b16 %v1971
    %v2258 = vunpack.c.h.b16 %v1971
    %v2259 = vunpack.c.l.b16 %v1972
    %v2260 = vunpack.c.l.b16 %v1973
    %v2261 = vunpack.c.h.b16 %v1973
    %v2262 = vunpack.c.l.b16 %v1974
    %v2263 = vunpack.c.l.b16 %v1975
    %v2264 = vunpack.c.h.b16 %v1975
    %v2265 = vunpack.c.l.b16 %v1976
    %v2266 = vunpack.c.l.b16 %v1977
    %v2267 = vunpack.c.h.b16 %v1977
    %v2268 = vunpack.c.l.b16 %v1978
    %v2269 = vunpack.c.l.b16 %v1979
    %v2270 = vunpack.c.h.b16 %v1979
    %v2271 = vunpack.c.l.b16 %v1980
    %v2272 = vunpack.c.l.b16 %v1981
    %v2273 = vunpack.c.h.b16 %v1981
    %v2274 = vunpack.c.l.b16 %v1982
    %v2275 = vunpack.c.l.b16 %v1983
    %v2276 = vunpack.c.h.b16 %v1983
    %v2277 = vunpack.c.l.b16 %v1984
    %v2278 = vunpack.c.l.b16 %v1985
    %v2279 = vunpack.c.h.b16 %v1985
    %v2280 = vunpack.c.l.b16 %v1986
    %v2281 = vunpack.c.l.b16 %v1987
    %v2282 = vunpack.c.h.b16 %v1987
    %v2283 = vunpack.c.l.b16 %v1988
    %v2284 = vunpack.c.l.b16 %v1989
    %v2285 = vunpack.c.h.b16 %v1989
    %v2286 = vunpack.c.l.b16 %v1990
    %v2287 = vunpack.c.l.b16 %v1991
    %v2288 = vunpack.c.h.b16 %v1991
    %v2289 = vunpack.c.l.b16 %v1992
    %v2290 = vunpack.c.l.b16 %v1993
    %v2291 = vunpack.c.h.b16 %v1993
    %v2292 = vunpack.c.l.b16 %v1994
    %v2293 = vunpack.c.l.b16 %v1995
    %v2294 = vunpack.c.h.b16 %v1995
    %v2295 = vunpack.c.l.b16 %v1996
    %v2296 = vunpack.c.l.b16 %v1997
    %v2297 = vunpack.c.h.b16 %v1997
    %v2298 = vunpack.c.l.b16 %v1998
    %v2299 = vunpack.c.l.b16 %v1999
    %v2300 = vunpack.c.h.b16 %v1999
    %v2301 = vunpack.c.l.b16 %v2000
    %v2302 = vunpack.c.l.b16 %v2001
    %v2303 = vunpack.c.h.b16 %v2001
    %v2304 = vunpack.c.l.b16 %v2002
    %v2305 = vunpack.c.l.b16 %v2003
    %v2306 = vunpack.c.h.b16 %v2003
    %v2307 = vunpack.c.l.b16 %v2004
    %v2308 = vunpack.c.l.b16 %v2005
    %v2309 = vunpack.c.h.b16 %v2005
    %v2310 = vunpack.c.l.b16 %v2006
    %v2311 = vunpack.c.l.b16 %v2007
    %v2312 = vunpack.c.h.b16 %v2007
    %v2313 = vunpack.c.l.b16 %v2008
    %v2314 = vunpack.c.l.b16 %v2009
    %v2315 = vunpack.c.h.b16 %v2009
    %v2316 = vunpack.c.l.b16 %v2010
    %v2317 = vunpack.c.l.b16 %v2011
    %v2318 = vunpack.c.h.b16 %v2011
    %v2319 = vunpack.c.l.b16 %v2012
    %v2320 = vunpack.c.l.b16 %v2013
    %v2321 = vunpack.c.h.b16 %v2013
    %v2322 = vunpack.c.l.b16 %v2014
    %v2323 = vunpack.c.l.b16 %v2015
    %v2324 = vunpack.c.h.b16 %v2015
    %v2325 = vunpack.c.l.b16 %v2016
    %v2326 = vunpack.c.l.b16 %v2017
    %v2327 = vunpack.c.h.b16 %v2017
    %v2328 = vunpack.c.l.b16 %v2018
    %v2329 = vunpack.c.l.b16 %v2019
    %v2330 = vunpack.c.h.b16 %v2019
    %v2331 = vunpack.c.l.b16 %v2020
    %v2332 = vunpack.c.l.b16 %v2021
    %v2333 = vunpack.c.h.b16 %v2021
    %v2334 = vunpack.c.l.b16 %v2022
    %v2335 = vunpack.c.l.b16 %v2023
    %v2336 = vunpack.c.h.b16 %v2023
    %v2337 = vunpack.c.l.b16 %v2024
    %v2338 = vunpack.c.l.b16 %v2025
    %v2339 = vunpack.c.h.b16 %v2025
    %v2340 = vunpack.c.l.b16 %v2026
    %v2341 = vunpack.c.l.b16 %v2027
    %v2342 = vunpack.c.h.b16 %v2027
    %v2343 = vunpack.c.l.b16 %v2028
    %v2344 = vunpack.c.l.b16 %v2029
    %v2345 = vunpack.c.h.b16 %v2029
    %v2346 = vunpack.c.l.b16 %v2030
    %v2347 = vunpack.c.l.b16 %v2031
    %v2348 = vunpack.c.h.b16 %v2031
    %v2349 = vunpack.c.l.b16 %v2032
    %v2350 = vunpack.c.l.b16 %v2033
    %v2351 = vunpack.c.h.b16 %v2033
    %v2352 = vunpack.c.l.b16 %v2034
    %v2353 = vunpack.c.l.b16 %v2035
    %v2354 = vunpack.c.h.b16 %v2035
    %v2355 = vunpack.c.l.b16 %v2036
    %v2356 = vunpack.c.l.b16 %v2037
    %v2357 = vunpack.c.h.b16 %v2037
    %v2358 = vunpack.c.l.b16 %v2038
    %v2359 = vunpack.c.l.b16 %v2039
    %v2360 = vunpack.c.h.b16 %v2039
    %v2361 = vunpack.c.l.b16 %v2040
    %v2362 = vunpack.c.l.b16 %v2041
    %v2363 = vunpack.c.h.b16 %v2041
    %v2364 = vunpack.c.l.b16 %v2042
    %v2365 = vunpack.c.l.b16 %v2043
    %v2366 = vunpack.c.h.b16 %v2043
    %v2367 = vunpack.c.l.b16 %v2044
    %v2368 = vunpack.c.l.b16 %v2045
    %v2369 = vunpack.c.h.b16 %v2045
    %v2370 = vunpack.c.l.b16 %v2046
    %v2371 = vunpack.c.l.b16 %v2047
    %v2372 = vunpack.c.h.b16 %v2047
    %v2373 = vunpack.c.l.b16 %v2048
    %v2374 = vunpack.c.l.b16 %v2049
    %v2375 = vunpack.c.h.b16 %v2049
    %v2376 = vunpack.c.l.b16 %v2050
    %v2377 = vunpack.c.l.b16 %v2051
    %v2378 = vunpack.c.h.b16 %v2051
    %v2379 = vunpack.c.l.b16 %v2052
    %v2380 = vunpack.c.l.b16 %v2053
    %v2381 = vunpack.c.h.b16 %v2053
    %v2382 = vunpack.c.l.b16 %v2054
    %v2383 = vpack.c.b16 %v2194, %v2191
    %v2384 = vpack.c.b16 %v2195, %v2192
    %v2385 = vpack.c.b16 %v2196, %v2193
    %v2386 = vpack.c.b16 %v2200, %v2197
    %v2387 = vpack.c.b16 %v2201, %v2198
    %v2388 = vpack.c.b16 %v2202, %v2199
    %v2389 = vpack.c.b16 %v2206, %v2203
    %v2390 = vpack.c.b16 %v2207, %v2204
    %v2391 = vpack.c.b16 %v2208, %v2205
    %v2392 = vpack.c.b16 %v2212, %v2209
    %v2393 = vpack.c.b16 %v2213, %v2210
    %v2394 = vpack.c.b16 %v2214, %v2211
    %v2395 = vpack.c.b16 %v2218, %v2215
    %v2396 = vpack.c.b16 %v2219, %v2216
    %v2397 = vpack.c.b16 %v2220, %v2217
    %v2398 = vpack.c.b16 %v2224, %v2221
    %v2399 = vpack.c.b16 %v2225, %v2222
    %v2400 = vpack.c.b16 %v2226, %v2223
    %v2401 = vpack.c.b16 %v2230, %v2227
    %v2402 = vpack.c.b16 %v2231, %v2228
    %v2403 = vpack.c.b16 %v2232, %v2229
    %v2404 = vpack.c.b16 %v2236, %v2233
    %v2405 = vpack.c.b16 %v2237, %v2234
    %v2406 = vpack.c.b16 %v2238, %v2235
    %v2407 = vpack.c.b16 %v2242, %v2239
    %v2408 = vpack.c.b16 %v2243, %v2240
    %v2409 = vpack.c.b16 %v2244, %v2241
    %v2410 = vpack.c.b16 %v2248, %v2245
    %v2411 = vpack.c.b16 %v2249, %v2246
    %v2412 = vpack.c.b16 %v2250, %v2247
    %v2413 = vpack.c.b16 %v2254, %v2251
    %v2414 = vpack.c.b16 %v2255, %v2252
    %v2415 = vpack.c.b16 %v2256, %v2253
    %v2416 = vpack.c.b16 %v2260, %v2257
    %v2417 = vpack.c.b16 %v2261, %v2258
    %v2418 = vpack.c.b16 %v2262, %v2259
    %v2419 = vpack.c.b16 %v2266, %v2263
    %v2420 = vpack.c.b16 %v2267, %v2264
    %v2421 = vpack.c.b16 %v2268, %v2265
    %v2422 = vpack.c.b16 %v2272, %v2269
    %v2423 = vpack.c.b16 %v2273, %v2270
    %v2424 = vpack.c.b16 %v2274, %v2271
    %v2425 = vpack.c.b16 %v2278, %v2275
    %v2426 = vpack.c.b16 %v2279, %v2276
    %v2427 = vpack.c.b16 %v2280, %v2277
    %v2428 = vpack.c.b16 %v2284, %v2281
    %v2429 = vpack.c.b16 %v2285, %v2282
    %v2430 = vpack.c.b16 %v2286, %v2283
    %v2431 = vpack.c.b16 %v2290, %v2287
    %v2432 = vpack.c.b16 %v2291, %v2288
    %v2433 = vpack.c.b16 %v2292, %v2289
    %v2434 = vpack.c.b16 %v2296, %v2293
    %v2435 = vpack.c.b16 %v2297, %v2294
    %v2436 = vpack.c.b16 %v2298, %v2295
    %v2437 = vpack.c.b16 %v2302, %v2299
    %v2438 = vpack.c.b16 %v2303, %v2300
    %v2439 = vpack.c.b16 %v2304, %v2301
    %v2440 = vpack.c.b16 %v2308, %v2305
    %v2441 = vpack.c.b16 %v2309, %v2306
    %v2442 = vpack.c.b16 %v2310, %v2307
    %v2443 = vpack.c.b16 %v2314, %v2311
    %v2444 = vpack.c.b16 %v2315, %v2312
    %v2445 = vpack.c.b16 %v2316, %v2313
    %v2446 = vpack.c.b16 %v2320, %v2317
    %v2447 = vpack.c.b16 %v2321, %v2318
    %v2448 = vpack.c.b16 %v2322, %v2319
    %v2449 = vpack.c.b16 %v2326, %v2323
    %v2450 = vpack.c.b16 %v2327, %v2324
    %v2451 = vpack.c.b16 %v2328, %v2325
    %v2452 = vpack.c.b16 %v2332, %v2329
    %v2453 = vpack.c.b16 %v2333, %v2330
    %v2454 = vpack.c.b16 %v2334, %v2331
    %v2455 = vpack.c.b16 %v2338, %v2335
    %v2456 = vpack.c.b16 %v2339, %v2336
    %v2457 = vpack.c.b16 %v2340, %v2337
    %v2458 = vpack.c.b16 %v2344, %v2341
    %v2459 = vpack.c.b16 %v2345, %v2342
    %v2460 = vpack.c.b16 %v2346, %v2343
    %v2461 = vpack.c.b16 %v2350, %v2347
    %v2462 = vpack.c.b16 %v2351, %v2348
    %v2463 = vpack.c.b16 %v2352, %v2349
    %v2464 = vpack.c.b16 %v2356, %v2353
    %v2465 = vpack.c.b16 %v2357, %v2354
    %v2466 = vpack.c.b16 %v2358, %v2355
    %v2467 = vpack.c.b16 %v2362, %v2359
    %v2468 = vpack.c.b16 %v2363, %v2360
    %v2469 = vpack.c.b16 %v2364, %v2361
    %v2470 = vpack.c.b16 %v2368, %v2365
    %v2471 = vpack.c.b16 %v2369, %v2366
    %v2472 = vpack.c.b16 %v2370, %v2367
    %v2473 = vpack.c.b16 %v2374, %v2371
    %v2474 = vpack.c.b16 %v2375, %v2372
    %v2475 = vpack.c.b16 %v2376, %v2373
    %v2476 = vpack.c.b16 %v2380, %v2377
    %v2477 = vpack.c.b16 %v2381, %v2378
    %v2478 = vpack.c.b16 %v2382, %v2379
    %2575 = vmatpush.bf16.msra.mxu0 %v2404
    %2576 = vmatpush.bf16.msra.mxu0 %v2401
    %2577 = vmatpush.bf16.msra.mxu0 %v2398
    %2578 = vmatpush.bf16.msra.mxu0 %v2395
    %2579 = vmatpush.bf16.msra.mxu0 %v2392
    %2580 = vmatpush.bf16.msra.mxu0 %v2389
    %2581 = vmatpush.bf16.msra.mxu0 %v2386
    %2582 = vmatpush.bf16.msra.mxu0 %v2383
    %2583 = vmatmul.bf16.gmra.mxu0 %v1923
    %v2584 = vpop.f32.mrf.mxu0
    %v2585 = vadd.f32 %v2057, %v2584
    %v2586 = vpop.f32.mrf.mxu0
    %v2587 = vadd.f32 %v2057, %v2586
    %2588 = vdwg.mxu0
    %2589 = vmatpush.bf16.msra.mxu0 %v2428
    %2590 = vmatpush.bf16.msra.mxu0 %v2425
    %2591 = vmatpush.bf16.msra.mxu0 %v2422
    %2592 = vmatpush.bf16.msra.mxu0 %v2419
    %2593 = vmatpush.bf16.msra.mxu0 %v2416
    %2594 = vmatpush.bf16.msra.mxu0 %v2413
    %2595 = vmatpush.bf16.msra.mxu0 %v2410
    %2596 = vmatpush.bf16.msra.mxu0 %v2407
    %2597 = vmatmul.bf16.gmra.mxu0 %v1924
    %v2598 = vpop.f32.mrf.mxu0
    %v2599 = vadd.f32 %v2585, %v2598
    %v2600 = vpop.f32.mrf.mxu0
    %v2601 = vadd.f32 %v2587, %v2600
    %2602 = vdwg.mxu0
    %2603 = vmatpush.bf16.msra.mxu0 %v2452
    %2604 = vmatpush.bf16.msra.mxu0 %v2449
    %2605 = vmatpush.bf16.msra.mxu0 %v2446
    %2606 = vmatpush.bf16.msra.mxu0 %v2443
    %2607 = vmatpush.bf16.msra.mxu0 %v2440
    %2608 = vmatpush.bf16.msra.mxu0 %v2437
    %2609 = vmatpush.bf16.msra.mxu0 %v2434
    %2610 = vmatpush.bf16.msra.mxu0 %v2431
    %2611 = vmatmul.bf16.gmra.mxu0 %v1925
    %v2612 = vpop.f32.mrf.mxu0
    %v2613 = vadd.f32 %v2599, %v2612
    %v2614 = vpop.f32.mrf.mxu0
    %v2615 = vadd.f32 %v2601, %v2614
    %2616 = vdwg.mxu0
    %2617 = vmatpush.bf16.msra.mxu0 %v2476
    %2618 = vmatpush.bf16.msra.mxu0 %v2473
    %2619 = vmatpush.bf16.msra.mxu0 %v2470
    %2620 = vmatpush.bf16.msra.mxu0 %v2467
    %2621 = vmatpush.bf16.msra.mxu0 %v2464
    %2622 = vmatpush.bf16.msra.mxu0 %v2461
    %2623 = vmatpush.bf16.msra.mxu0 %v2458
    %2624 = vmatpush.bf16.msra.mxu0 %v2455
    %2625 = vmatmul.bf16.gmra.mxu0 %v1926
    %v2626 = vpop.f32.mrf.mxu0
    %v2627 = vadd.f32 %v2613, %v2626
    %v2628 = vpop.f32.mrf.mxu0
    %v2629 = vadd.f32 %v2615, %v2628
    %2630 = vdwg.mxu0
    %2631 = vmatpush.bf16.msra.mxu0 %v2405
    %2632 = vmatpush.bf16.msra.mxu0 %v2402
    %2633 = vmatpush.bf16.msra.mxu0 %v2399
    %2634 = vmatpush.bf16.msra.mxu0 %v2396
    %2635 = vmatpush.bf16.msra.mxu0 %v2393
    %2636 = vmatpush.bf16.msra.mxu0 %v2390
    %2637 = vmatpush.bf16.msra.mxu0 %v2387
    %2638 = vmatpush.bf16.msra.mxu0 %v2384
    %2639 = vmatmul.bf16.gmra.mxu0 %v1923
    %v2640 = vpop.f32.mrf.mxu0
    %v2641 = vadd.f32 %v2058, %v2640
    %v2642 = vpop.f32.mrf.mxu0
    %v2643 = vadd.f32 %v2058, %v2642
    %2644 = vdwg.mxu0
    %2645 = vmatpush.bf16.msra.mxu0 %v2429
    %2646 = vmatpush.bf16.msra.mxu0 %v2426
    %2647 = vmatpush.bf16.msra.mxu0 %v2423
    %2648 = vmatpush.bf16.msra.mxu0 %v2420
    %2649 = vmatpush.bf16.msra.mxu0 %v2417
    %2650 = vmatpush.bf16.msra.mxu0 %v2414
    %2651 = vmatpush.bf16.msra.mxu0 %v2411
    %2652 = vmatpush.bf16.msra.mxu0 %v2408
    %2653 = vmatmul.bf16.gmra.mxu0 %v1924
    %v2654 = vpop.f32.mrf.mxu0
    %v2655 = vadd.f32 %v2641, %v2654
    %v2656 = vpop.f32.mrf.mxu0
    %v2657 = vadd.f32 %v2643, %v2656
    %2658 = vdwg.mxu0
    %2659 = vmatpush.bf16.msra.mxu0 %v2453
    %2660 = vmatpush.bf16.msra.mxu0 %v2450
    %2661 = vmatpush.bf16.msra.mxu0 %v2447
    %2662 = vmatpush.bf16.msra.mxu0 %v2444
    %2663 = vmatpush.bf16.msra.mxu0 %v2441
    %2664 = vmatpush.bf16.msra.mxu0 %v2438
    %2665 = vmatpush.bf16.msra.mxu0 %v2435
    %2666 = vmatpush.bf16.msra.mxu0 %v2432
    %2667 = vmatmul.bf16.gmra.mxu0 %v1925
    %v2668 = vpop.f32.mrf.mxu0
    %v2669 = vadd.f32 %v2655, %v2668
    %v2670 = vpop.f32.mrf.mxu0
    %v2671 = vadd.f32 %v2657, %v2670
    %2672 = vdwg.mxu0
    %2673 = vmatpush.bf16.msra.mxu0 %v2477
    %2674 = vmatpush.bf16.msra.mxu0 %v2474
    %2675 = vmatpush.bf16.msra.mxu0 %v2471
    %2676 = vmatpush.bf16.msra.mxu0 %v2468
    %2677 = vmatpush.bf16.msra.mxu0 %v2465
    %2678 = vmatpush.bf16.msra.mxu0 %v2462
    %2679 = vmatpush.bf16.msra.mxu0 %v2459
    %2680 = vmatpush.bf16.msra.mxu0 %v2456
    %2681 = vmatmul.bf16.gmra.mxu0 %v1926
    %v2682 = vpop.f32.mrf.mxu0
    %v2683 = vadd.f32 %v2669, %v2682
    %v2684 = vpop.f32.mrf.mxu0
    %v2685 = vadd.f32 %v2671, %v2684
    %2686 = vdwg.mxu0
    %2687 = vmatpush.bf16.msra.mxu0 %v2406
    %2688 = vmatpush.bf16.msra.mxu0 %v2403
    %2689 = vmatpush.bf16.msra.mxu0 %v2400
    %2690 = vmatpush.bf16.msra.mxu0 %v2397
    %2691 = vmatpush.bf16.msra.mxu0 %v2394
    %2692 = vmatpush.bf16.msra.mxu0 %v2391
    %2693 = vmatpush.bf16.msra.mxu0 %v2388
    %2694 = vmatpush.bf16.msra.mxu0 %v2385
    %2695 = vmatmul.bf16.gmra.mxu0 %v1923
    %v2696 = vpop.f32.mrf.mxu0
    %v2697 = vadd.f32 %v2059, %v2696
    %v2698 = vpop.f32.mrf.mxu0
    %v2699 = vadd.f32 %v2059, %v2698
    %2700 = vdwg.mxu0
    %2701 = vmatpush.bf16.msra.mxu0 %v2430
    %2702 = vmatpush.bf16.msra.mxu0 %v2427
    %2703 = vmatpush.bf16.msra.mxu0 %v2424
    %2704 = vmatpush.bf16.msra.mxu0 %v2421
    %2705 = vmatpush.bf16.msra.mxu0 %v2418
    %2706 = vmatpush.bf16.msra.mxu0 %v2415
    %2707 = vmatpush.bf16.msra.mxu0 %v2412
    %2708 = vmatpush.bf16.msra.mxu0 %v2409
    %2709 = vmatmul.bf16.gmra.mxu0 %v1924
    %v2710 = vpop.f32.mrf.mxu0
    %v2711 = vadd.f32 %v2697, %v2710
    %v2712 = vpop.f32.mrf.mxu0
    %v2713 = vadd.f32 %v2699, %v2712
    %2714 = vdwg.mxu0
    %2715 = vmatpush.bf16.msra.mxu0 %v2454
    %2716 = vmatpush.bf16.msra.mxu0 %v2451
    %2717 = vmatpush.bf16.msra.mxu0 %v2448
    %2718 = vmatpush.bf16.msra.mxu0 %v2445
    %2719 = vmatpush.bf16.msra.mxu0 %v2442
    %2720 = vmatpush.bf16.msra.mxu0 %v2439
    %2721 = vmatpush.bf16.msra.mxu0 %v2436
    %2722 = vmatpush.bf16.msra.mxu0 %v2433
    %2723 = vmatmul.bf16.gmra.mxu0 %v1925
    %v2724 = vpop.f32.mrf.mxu0
    %v2725 = vadd.f32 %v2711, %v2724
    %v2726 = vpop.f32.mrf.mxu0
    %v2727 = vadd.f32 %v2713, %v2726
    %2728 = vdwg.mxu0
    %2729 = vmatpush.bf16.msra.mxu0 %v2478
    %2730 = vmatpush.bf16.msra.mxu0 %v2475
    %2731 = vmatpush.bf16.msra.mxu0 %v2472
    %2732 = vmatpush.bf16.msra.mxu0 %v2469
    %2733 = vmatpush.bf16.msra.mxu0 %v2466
    %2734 = vmatpush.bf16.msra.mxu0 %v2463
    %2735 = vmatpush.bf16.msra.mxu0 %v2460
    %2736 = vmatpush.bf16.msra.mxu0 %v2457
    %2737 = vmatmul.bf16.gmra.mxu0 %v1926
    %v2738 = vpop.f32.mrf.mxu0
    %v2739 = vadd.f32 %v2725, %v2738
    %v2740 = vpop.f32.mrf.mxu0
    %v2741 = vadd.f32 %v2727, %v2740
    %2742 = vdwg.mxu0
    %v2743 = vmax.f32 %v2627, 0.0
    %v2744 = vmax.f32 %v2683, 0.0
    %v2745 = vmax.f32 %v2739, 0.0
    %v2746 = vmax.f32 %v2629, 0.0
    %v2747 = vmax.f32 %v2685, 0.0
    %v2748 = vmax.f32 %v2741, 0.0
    %v2749 = vpack.c.bf16 %v2746, %v2743
    %v2750 = vpack.c.bf16 %v2747, %v2744
    %v2751 = vpack.c.bf16 %v2748, %v2745
    %v2752 = vld [vmem:[#allocation10] sm:$0xff]
    %v2753 = vld [vmem:[#allocation10 + $0x8] sm:$0xff]
    %v2754 = vld [vmem:[#allocation10 + $0x10] sm:$0xff]
    %v2755 = vld [vmem:[#allocation10 + $0x18] sm:$0xff]
    %v2756 = vld [vmem:[#allocation10 + $0x20] sm:$0xff]
    %v2757 = vld [vmem:[#allocation10 + $0x28] sm:$0xff]
    %v2758 = vld [vmem:[#allocation10 + $0x30] sm:$0xff]
    %v2759 = vld [vmem:[#allocation10 + $0x38] sm:$0xff]
    %v2760 = vld [vmem:[#allocation10 + $0x40] sm:$0xff]
    %v2761 = vld [vmem:[#allocation10 + $0x48] sm:$0xff]
    %v2762 = vld [vmem:[#allocation10 + $0x50] sm:$0xff]
    %v2763 = vld [vmem:[#allocation10 + $0x58] sm:$0xff]
    %v2764 = vld [vmem:[#allocation10 + $0x60] sm:$0xff]
    %v2765 = vld [vmem:[#allocation10 + $0x68] sm:$0xff]
    %v2766 = vld [vmem:[#allocation10 + $0x70] sm:$0xff]
    %v2767 = vld [vmem:[#allocation10 + $0x78] sm:$0xff]
    %v2768 = vld [vmem:[#allocation10 + $0x80] sm:$0xff]
    %v2769 = vld [vmem:[#allocation10 + $0x88] sm:$0xff]
    %v2770 = vld [vmem:[#allocation10 + $0x90] sm:$0xff]
    %v2771 = vld [vmem:[#allocation10 + $0x98] sm:$0xff]
    %v2772 = vld [vmem:[#allocation10 + $0xa0] sm:$0xff]
    %v2773 = vld [vmem:[#allocation10 + $0xa8] sm:$0xff]
    %v2774 = vld [vmem:[#allocation10 + $0xb0] sm:$0xff]
    %v2775 = vld [vmem:[#allocation10 + $0xb8] sm:$0xff]
    %v2776 = vld [vmem:[#allocation10 + $0xc0] sm:$0xff]
    %v2777 = vld [vmem:[#allocation10 + $0xc8] sm:$0xff]
    %v2778 = vld [vmem:[#allocation10 + $0xd0] sm:$0xff]
    %v2779 = vld [vmem:[#allocation10 + $0xd8] sm:$0xff]
    %v2780 = vld [vmem:[#allocation10 + $0xe0] sm:$0xff]
    %v2781 = vld [vmem:[#allocation10 + $0xe8] sm:$0xff]
    %v2782 = vld [vmem:[#allocation10 + $0xf0] sm:$0xff]
    %v2783 = vld [vmem:[#allocation10 + $0xf8] sm:$0xff]
    %v2784 = vld [vmem:[#allocation10 + $0x100] sm:$0xff]
    %v2785 = vld [vmem:[#allocation10 + $0x108] sm:$0xff]
    %v2786 = vld [vmem:[#allocation10 + $0x110] sm:$0xff]
    %v2787 = vld [vmem:[#allocation10 + $0x118] sm:$0xff]
    %v2788 = vld [vmem:[#allocation10 + $0x120] sm:$0xff]
    %v2789 = vld [vmem:[#allocation10 + $0x128] sm:$0xff]
    %v2790 = vld [vmem:[#allocation10 + $0x130] sm:$0xff]
    %v2791 = vld [vmem:[#allocation10 + $0x138] sm:$0xff]
    %v2792 = vld [vmem:[#allocation10 + $0x140] sm:$0xff]
    %v2793 = vld [vmem:[#allocation10 + $0x148] sm:$0xff]
    %v2794 = vld [vmem:[#allocation10 + $0x150] sm:$0xff]
    %v2795 = vld [vmem:[#allocation10 + $0x158] sm:$0xff]
    %v2796 = vld [vmem:[#allocation10 + $0x160] sm:$0xff]
    %v2797 = vld [vmem:[#allocation10 + $0x168] sm:$0xff]
    %v2798 = vld [vmem:[#allocation10 + $0x170] sm:$0xff]
    %v2799 = vld [vmem:[#allocation10 + $0x178] sm:$0xff]
    %v2800 = vld [vmem:[%s6] sm:$0x3]
    %v2802 = vperm.slane %v2800, 0
    %v2803 = vperm.slane %v2800, 1
    %v2854 = vunpack.c.l.b16 %v2752
    %v2855 = vunpack.c.h.b16 %v2752
    %v2856 = vunpack.c.l.b16 %v2753
    %v2857 = vunpack.c.h.b16 %v2753
    %v2858 = vunpack.c.l.b16 %v2754
    %v2859 = vunpack.c.h.b16 %v2754
    %v2860 = vunpack.c.l.b16 %v2755
    %v2861 = vunpack.c.h.b16 %v2755
    %v2862 = vunpack.c.l.b16 %v2756
    %v2863 = vunpack.c.h.b16 %v2756
    %v2864 = vunpack.c.l.b16 %v2757
    %v2865 = vunpack.c.h.b16 %v2757
    %v2866 = vunpack.c.l.b16 %v2758
    %v2867 = vunpack.c.h.b16 %v2758
    %v2868 = vunpack.c.l.b16 %v2759
    %v2869 = vunpack.c.h.b16 %v2759
    %v2870 = vunpack.c.l.b16 %v2760
    %v2871 = vunpack.c.h.b16 %v2760
    %v2872 = vunpack.c.l.b16 %v2761
    %v2873 = vunpack.c.h.b16 %v2761
    %v2874 = vunpack.c.l.b16 %v2762
    %v2875 = vunpack.c.h.b16 %v2762
    %v2876 = vunpack.c.l.b16 %v2763
    %v2877 = vunpack.c.h.b16 %v2763
    %v2878 = vunpack.c.l.b16 %v2764
    %v2879 = vunpack.c.h.b16 %v2764
    %v2880 = vunpack.c.l.b16 %v2765
    %v2881 = vunpack.c.h.b16 %v2765
    %v2882 = vunpack.c.l.b16 %v2766
    %v2883 = vunpack.c.h.b16 %v2766
    %v2884 = vunpack.c.l.b16 %v2767
    %v2885 = vunpack.c.h.b16 %v2767
    %v2886 = vunpack.c.l.b16 %v2768
    %v2887 = vunpack.c.h.b16 %v2768
    %v2888 = vunpack.c.l.b16 %v2769
    %v2889 = vunpack.c.h.b16 %v2769
    %v2890 = vunpack.c.l.b16 %v2770
    %v2891 = vunpack.c.h.b16 %v2770
    %v2892 = vunpack.c.l.b16 %v2771
    %v2893 = vunpack.c.h.b16 %v2771
    %v2894 = vunpack.c.l.b16 %v2772
    %v2895 = vunpack.c.h.b16 %v2772
    %v2896 = vunpack.c.l.b16 %v2773
    %v2897 = vunpack.c.h.b16 %v2773
    %v2898 = vunpack.c.l.b16 %v2774
    %v2899 = vunpack.c.h.b16 %v2774
    %v2900 = vunpack.c.l.b16 %v2775
    %v2901 = vunpack.c.h.b16 %v2775
    %v2902 = vunpack.c.l.b16 %v2776
    %v2903 = vunpack.c.h.b16 %v2776
    %v2904 = vunpack.c.l.b16 %v2777
    %v2905 = vunpack.c.h.b16 %v2777
    %v2906 = vunpack.c.l.b16 %v2778
    %v2907 = vunpack.c.h.b16 %v2778
    %v2908 = vunpack.c.l.b16 %v2779
    %v2909 = vunpack.c.h.b16 %v2779
    %v2910 = vunpack.c.l.b16 %v2780
    %v2911 = vunpack.c.h.b16 %v2780
    %v2912 = vunpack.c.l.b16 %v2781
    %v2913 = vunpack.c.h.b16 %v2781
    %v2914 = vunpack.c.l.b16 %v2782
    %v2915 = vunpack.c.h.b16 %v2782
    %v2916 = vunpack.c.l.b16 %v2783
    %v2917 = vunpack.c.h.b16 %v2783
    %v2918 = vunpack.c.l.b16 %v2784
    %v2919 = vunpack.c.h.b16 %v2784
    %v2920 = vunpack.c.l.b16 %v2785
    %v2921 = vunpack.c.h.b16 %v2785
    %v2922 = vunpack.c.l.b16 %v2786
    %v2923 = vunpack.c.h.b16 %v2786
    %v2924 = vunpack.c.l.b16 %v2787
    %v2925 = vunpack.c.h.b16 %v2787
    %v2926 = vunpack.c.l.b16 %v2788
    %v2927 = vunpack.c.h.b16 %v2788
    %v2928 = vunpack.c.l.b16 %v2789
    %v2929 = vunpack.c.h.b16 %v2789
    %v2930 = vunpack.c.l.b16 %v2790
    %v2931 = vunpack.c.h.b16 %v2790
    %v2932 = vunpack.c.l.b16 %v2791
    %v2933 = vunpack.c.h.b16 %v2791
    %v2934 = vunpack.c.l.b16 %v2792
    %v2935 = vunpack.c.h.b16 %v2792
    %v2936 = vunpack.c.l.b16 %v2793
    %v2937 = vunpack.c.h.b16 %v2793
    %v2938 = vunpack.c.l.b16 %v2794
    %v2939 = vunpack.c.h.b16 %v2794
    %v2940 = vunpack.c.l.b16 %v2795
    %v2941 = vunpack.c.h.b16 %v2795
    %v2942 = vunpack.c.l.b16 %v2796
    %v2943 = vunpack.c.h.b16 %v2796
    %v2944 = vunpack.c.l.b16 %v2797
    %v2945 = vunpack.c.h.b16 %v2797
    %v2946 = vunpack.c.l.b16 %v2798
    %v2947 = vunpack.c.h.b16 %v2798
    %v2948 = vunpack.c.l.b16 %v2799
    %v2949 = vunpack.c.h.b16 %v2799
    %v2950 = vpack.c.b16 %v2856, %v2854
    %v2951 = vpack.c.b16 %v2857, %v2855
    %v2952 = vpack.c.b16 %v2860, %v2858
    %v2953 = vpack.c.b16 %v2861, %v2859
    %v2954 = vpack.c.b16 %v2864, %v2862
    %v2955 = vpack.c.b16 %v2865, %v2863
    %v2956 = vpack.c.b16 %v2868, %v2866
    %v2957 = vpack.c.b16 %v2869, %v2867
    %v2958 = vpack.c.b16 %v2872, %v2870
    %v2959 = vpack.c.b16 %v2873, %v2871
    %v2960 = vpack.c.b16 %v2876, %v2874
    %v2961 = vpack.c.b16 %v2877, %v2875
    %v2962 = vpack.c.b16 %v2880, %v2878
    %v2963 = vpack.c.b16 %v2881, %v2879
    %v2964 = vpack.c.b16 %v2884, %v2882
    %v2965 = vpack.c.b16 %v2885, %v2883
    %v2966 = vpack.c.b16 %v2888, %v2886
    %v2967 = vpack.c.b16 %v2889, %v2887
    %v2968 = vpack.c.b16 %v2892, %v2890
    %v2969 = vpack.c.b16 %v2893, %v2891
    %v2970 = vpack.c.b16 %v2896, %v2894
    %v2971 = vpack.c.b16 %v2897, %v2895
    %v2972 = vpack.c.b16 %v2900, %v2898
    %v2973 = vpack.c.b16 %v2901, %v2899
    %v2974 = vpack.c.b16 %v2904, %v2902
    %v2975 = vpack.c.b16 %v2905, %v2903
    %v2976 = vpack.c.b16 %v2908, %v2906
    %v2977 = vpack.c.b16 %v2909, %v2907
    %v2978 = vpack.c.b16 %v2912, %v2910
    %v2979 = vpack.c.b16 %v2913, %v2911
    %v2980 = vpack.c.b16 %v2916, %v2914
    %v2981 = vpack.c.b16 %v2917, %v2915
    %v2982 = vpack.c.b16 %v2920, %v2918
    %v2983 = vpack.c.b16 %v2921, %v2919
    %v2984 = vpack.c.b16 %v2924, %v2922
    %v2985 = vpack.c.b16 %v2925, %v2923
    %v2986 = vpack.c.b16 %v2928, %v2926
    %v2987 = vpack.c.b16 %v2929, %v2927
    %v2988 = vpack.c.b16 %v2932, %v2930
    %v2989 = vpack.c.b16 %v2933, %v2931
    %v2990 = vpack.c.b16 %v2936, %v2934
    %v2991 = vpack.c.b16 %v2937, %v2935
    %v2992 = vpack.c.b16 %v2940, %v2938
    %v2993 = vpack.c.b16 %v2941, %v2939
    %v2994 = vpack.c.b16 %v2944, %v2942
    %v2995 = vpack.c.b16 %v2945, %v2943
    %v2996 = vpack.c.b16 %v2948, %v2946
    %v2997 = vpack.c.b16 %v2949, %v2947
    %3046 = vmatpush.bf16.msra.mxu0 %v2964
    %3047 = vmatpush.bf16.msra.mxu0 %v2962
    %3048 = vmatpush.bf16.msra.mxu0 %v2960
    %3049 = vmatpush.bf16.msra.mxu0 %v2958
    %3050 = vmatpush.bf16.msra.mxu0 %v2956
    %3051 = vmatpush.bf16.msra.mxu0 %v2954
    %3052 = vmatpush.bf16.msra.mxu0 %v2952
    %3053 = vmatpush.bf16.msra.mxu0 %v2950
    %3054 = vmatmul.bf16.gmra.mxu0 %v2749
    %v3055 = vpop.f32.mrf.mxu0
    %v3056 = vadd.f32 %v2802, %v3055
    %v3057 = vpop.f32.mrf.mxu0
    %v3058 = vadd.f32 %v2802, %v3057
    %3059 = vdwg.mxu0
    %3060 = vmatpush.bf16.msra.mxu0 %v2980
    %3061 = vmatpush.bf16.msra.mxu0 %v2978
    %3062 = vmatpush.bf16.msra.mxu0 %v2976
    %3063 = vmatpush.bf16.msra.mxu0 %v2974
    %3064 = vmatpush.bf16.msra.mxu0 %v2972
    %3065 = vmatpush.bf16.msra.mxu0 %v2970
    %3066 = vmatpush.bf16.msra.mxu0 %v2968
    %3067 = vmatpush.bf16.msra.mxu0 %v2966
    %3068 = vmatmul.bf16.gmra.mxu0 %v2750
    %v3069 = vpop.f32.mrf.mxu0
    %v3070 = vadd.f32 %v3056, %v3069
    %v3071 = vpop.f32.mrf.mxu0
    %v3072 = vadd.f32 %v3058, %v3071
    %3073 = vdwg.mxu0
    %3074 = vmatpush.bf16.msra.mxu0 %v2996
    %3075 = vmatpush.bf16.msra.mxu0 %v2994
    %3076 = vmatpush.bf16.msra.mxu0 %v2992
    %3077 = vmatpush.bf16.msra.mxu0 %v2990
    %3078 = vmatpush.bf16.msra.mxu0 %v2988
    %3079 = vmatpush.bf16.msra.mxu0 %v2986
    %3080 = vmatpush.bf16.msra.mxu0 %v2984
    %3081 = vmatpush.bf16.msra.mxu0 %v2982
    %3082 = vmatmul.bf16.gmra.mxu0 %v2751
    %v3083 = vpop.f32.mrf.mxu0
    %v3084 = vadd.f32 %v3070, %v3083
    %v3085 = vpop.f32.mrf.mxu0
    %v3086 = vadd.f32 %v3072, %v3085
    %3087 = vdwg.mxu0
    %3088 = vmatpush.bf16.msra.mxu0 %v2965
    %3089 = vmatpush.bf16.msra.mxu0 %v2963
    %3090 = vmatpush.bf16.msra.mxu0 %v2961
    %3091 = vmatpush.bf16.msra.mxu0 %v2959
    %3092 = vmatpush.bf16.msra.mxu0 %v2957
    %3093 = vmatpush.bf16.msra.mxu0 %v2955
    %3094 = vmatpush.bf16.msra.mxu0 %v2953
    %3095 = vmatpush.bf16.msra.mxu0 %v2951
    %3096 = vmatmul.bf16.gmra.mxu0 %v2749
    %v3097 = vpop.f32.mrf.mxu0
    %v3098 = vadd.f32 %v2803, %v3097
    %v3099 = vpop.f32.mrf.mxu0
    %v3100 = vadd.f32 %v2803, %v3099
    %3101 = vdwg.mxu0
    %3102 = vmatpush.bf16.msra.mxu0 %v2981
    %3103 = vmatpush.bf16.msra.mxu0 %v2979
    %3104 = vmatpush.bf16.msra.mxu0 %v2977
    %3105 = vmatpush.bf16.msra.mxu0 %v2975
    %3106 = vmatpush.bf16.msra.mxu0 %v2973
    %3107 = vmatpush.bf16.msra.mxu0 %v2971
    %3108 = vmatpush.bf16.msra.mxu0 %v2969
    %3109 = vmatpush.bf16.msra.mxu0 %v2967
    %3110 = vmatmul.bf16.gmra.mxu0 %v2750
    %v3111 = vpop.f32.mrf.mxu0
    %v3112 = vadd.f32 %v3098, %v3111
    %v3113 = vpop.f32.mrf.mxu0
    %v3114 = vadd.f32 %v3100, %v3113
    %3115 = vdwg.mxu0
    %3116 = vmatpush.bf16.msra.mxu0 %v2997
    %3117 = vmatpush.bf16.msra.mxu0 %v2995
    %3118 = vmatpush.bf16.msra.mxu0 %v2993
    %3119 = vmatpush.bf16.msra.mxu0 %v2991
    %3120 = vmatpush.bf16.msra.mxu0 %v2989
    %3121 = vmatpush.bf16.msra.mxu0 %v2987
    %3122 = vmatpush.bf16.msra.mxu0 %v2985
    %3123 = vmatpush.bf16.msra.mxu0 %v2983
    %3124 = vmatmul.bf16.gmra.mxu0 %v2751
    %v3125 = vpop.f32.mrf.mxu0
    %v3126 = vadd.f32 %v3112, %v3125
    %v3127 = vpop.f32.mrf.mxu0
    %v3128 = vadd.f32 %v3114, %v3127
    %3129 = vdwg.mxu0
    %v3130 = vmax.f32 %v3084, 0.0
    %v3131 = vmax.f32 %v3126, 0.0
    %v3132 = vmax.f32 %v3086, 0.0
    %v3133 = vmax.f32 %v3128, 0.0
    %v3134 = vpack.c.bf16 %v3132, %v3130
    %v3135 = vpack.c.bf16 %v3133, %v3131
    %v3136 = vld [vmem:[#allocation11] sm:$0xf]
    %v3137 = vld [vmem:[#allocation11 + $0x4] sm:$0xf]
    %v3138 = vld [vmem:[#allocation11 + $0x8] sm:$0xf]
    %v3139 = vld [vmem:[#allocation11 + $0xc] sm:$0xf]
    %v3140 = vld [vmem:[#allocation11 + $0x10] sm:$0xf]
    %v3141 = vld [vmem:[#allocation11 + $0x14] sm:$0xf]
    %v3142 = vld [vmem:[#allocation11 + $0x18] sm:$0xf]
    %v3143 = vld [vmem:[#allocation11 + $0x1c] sm:$0xf]
    %v3144 = vld [vmem:[#allocation11 + $0x20] sm:$0xf]
    %v3145 = vld [vmem:[#allocation11 + $0x24] sm:$0xf]
    %v3146 = vld [vmem:[#allocation11 + $0x28] sm:$0xf]
    %v3147 = vld [vmem:[#allocation11 + $0x2c] sm:$0xf]
    %v3148 = vld [vmem:[#allocation11 + $0x30] sm:$0xf]
    %v3149 = vld [vmem:[#allocation11 + $0x34] sm:$0xf]
    %v3150 = vld [vmem:[#allocation11 + $0x38] sm:$0xf]
    %v3151 = vld [vmem:[#allocation11 + $0x3c] sm:$0xf]
    %v3152 = vld [vmem:[#allocation11 + $0x40] sm:$0xf]
    %v3153 = vld [vmem:[#allocation11 + $0x44] sm:$0xf]
    %v3154 = vld [vmem:[#allocation11 + $0x48] sm:$0xf]
    %v3155 = vld [vmem:[#allocation11 + $0x4c] sm:$0xf]
    %v3156 = vld [vmem:[#allocation11 + $0x50] sm:$0xf]
    %v3157 = vld [vmem:[#allocation11 + $0x54] sm:$0xf]
    %v3158 = vld [vmem:[#allocation11 + $0x58] sm:$0xf]
    %v3159 = vld [vmem:[#allocation11 + $0x5c] sm:$0xf]
    %v3160 = vld [vmem:[#allocation11 + $0x60] sm:$0xf]
    %v3161 = vld [vmem:[#allocation11 + $0x64] sm:$0xf]
    %v3162 = vld [vmem:[#allocation11 + $0x68] sm:$0xf]
    %v3163 = vld [vmem:[#allocation11 + $0x6c] sm:$0xf]
    %v3164 = vld [vmem:[#allocation11 + $0x70] sm:$0xf]
    %v3165 = vld [vmem:[#allocation11 + $0x74] sm:$0xf]
    %v3166 = vld [vmem:[#allocation11 + $0x78] sm:$0xf]
    %v3167 = vld [vmem:[#allocation11 + $0x7c] sm:$0xf]
    %v3168 = vld [vmem:[%s8] sm:$0x1]
    %v3170 = vperm.slane %v3168, 0
    %v3204 = vunpack.c.l.b16 %v3136
    %v3205 = vunpack.c.l.b16 %v3137
    %v3206 = vunpack.c.l.b16 %v3138
    %v3207 = vunpack.c.l.b16 %v3139
    %v3208 = vunpack.c.l.b16 %v3140
    %v3209 = vunpack.c.l.b16 %v3141
    %v3210 = vunpack.c.l.b16 %v3142
    %v3211 = vunpack.c.l.b16 %v3143
    %v3212 = vunpack.c.l.b16 %v3144
    %v3213 = vunpack.c.l.b16 %v3145
    %v3214 = vunpack.c.l.b16 %v3146
    %v3215 = vunpack.c.l.b16 %v3147
    %v3216 = vunpack.c.l.b16 %v3148
    %v3217 = vunpack.c.l.b16 %v3149
    %v3218 = vunpack.c.l.b16 %v3150
    %v3219 = vunpack.c.l.b16 %v3151
    %v3220 = vunpack.c.l.b16 %v3152
    %v3221 = vunpack.c.l.b16 %v3153
    %v3222 = vunpack.c.l.b16 %v3154
    %v3223 = vunpack.c.l.b16 %v3155
    %v3224 = vunpack.c.l.b16 %v3156
    %v3225 = vunpack.c.l.b16 %v3157
    %v3226 = vunpack.c.l.b16 %v3158
    %v3227 = vunpack.c.l.b16 %v3159
    %v3228 = vunpack.c.l.b16 %v3160
    %v3229 = vunpack.c.l.b16 %v3161
    %v3230 = vunpack.c.l.b16 %v3162
    %v3231 = vunpack.c.l.b16 %v3163
    %v3232 = vunpack.c.l.b16 %v3164
    %v3233 = vunpack.c.l.b16 %v3165
    %v3234 = vunpack.c.l.b16 %v3166
    %v3235 = vunpack.c.l.b16 %v3167
    %v3236 = vpack.c.b16 %v3205, %v3204
    %v3237 = vpack.c.b16 %v3207, %v3206
    %v3238 = vpack.c.b16 %v3209, %v3208
    %v3239 = vpack.c.b16 %v3211, %v3210
    %v3240 = vpack.c.b16 %v3213, %v3212
    %v3241 = vpack.c.b16 %v3215, %v3214
    %v3242 = vpack.c.b16 %v3217, %v3216
    %v3243 = vpack.c.b16 %v3219, %v3218
    %v3244 = vpack.c.b16 %v3221, %v3220
    %v3245 = vpack.c.b16 %v3223, %v3222
    %v3246 = vpack.c.b16 %v3225, %v3224
    %v3247 = vpack.c.b16 %v3227, %v3226
    %v3248 = vpack.c.b16 %v3229, %v3228
    %v3249 = vpack.c.b16 %v3231, %v3230
    %v3250 = vpack.c.b16 %v3233, %v3232
    %v3251 = vpack.c.b16 %v3235, %v3234
    %3268 = vmatpush.bf16.msra.mxu0 %v3243
    %3269 = vmatpush.bf16.msra.mxu0 %v3242
    %3270 = vmatpush.bf16.msra.mxu0 %v3241
    %3271 = vmatpush.bf16.msra.mxu0 %v3240
    %3272 = vmatpush.bf16.msra.mxu0 %v3239
    %3273 = vmatpush.bf16.msra.mxu0 %v3238
    %3274 = vmatpush.bf16.msra.mxu0 %v3237
    %3275 = vmatpush.bf16.msra.mxu0 %v3236
    %3276 = vmatmul.bf16.gmra.mxu0 %v3134
    %v3277 = vpop.f32.mrf.mxu0
    %v3278 = vadd.f32 %v3170, %v3277
    %v3279 = vpop.f32.mrf.mxu0
    %v3280 = vadd.f32 %v3170, %v3279
    %3281 = vdwg.mxu0
    %3282 = vmatpush.bf16.msra.mxu0 %v3251
    %3283 = vmatpush.bf16.msra.mxu0 %v3250
    %3284 = vmatpush.bf16.msra.mxu0 %v3249
    %3285 = vmatpush.bf16.msra.mxu0 %v3248
    %3286 = vmatpush.bf16.msra.mxu0 %v3247
    %3287 = vmatpush.bf16.msra.mxu0 %v3246
    %3288 = vmatpush.bf16.msra.mxu0 %v3245
    %3289 = vmatpush.bf16.msra.mxu0 %v3244
    %3290 = vmatmul.bf16.gmra.mxu0 %v3135
    %v3291 = vpop.f32.mrf.mxu0
    %v3292 = vadd.f32 %v3278, %v3291
    %v3293 = vpop.f32.mrf.mxu0
    %v3294 = vadd.f32 %v3280, %v3293
    %3295 = vdwg.mxu0
    %3296 = vst [vmem:[#allocation13] sm:$0xff] %v3292
    %3297 = vst [vmem:[#allocation13 + $0x8] sm:$0xff] %v3294
    // Predicated region
    $region62: #{tpu_custom_call.1} parent=1 // pred_check
      _
    $region63: #{tpu_custom_call.1} parent=1 // pred_check_branch
      %3299 = sbr.rel (0) target = $region65
    $region64: #{tpu_custom_call.1} parent=1 // pred_region
      %3301 = vsyncadd [#allocation4], 0
      %s3302 = sshll.u32 [#allocation13], 4
      %s3303 = int_to_ptr.vmem [resolvable:$true] %s3302
      %s3304 = sshll.u32 %s9, 4
      %s3305 = int_to_ptr.hbm [resolvable:$true] %s3304
      %3310 = dma.vmem_to_hbm [thread:$0]  %s3303, 256, %s3305, [#allocation4], 128, 128, 8
    $region65: #{tpu_custom_call.1} parent=1 // pred_fallthru
      _
    // Predicated region
    $region66: #{tpu_custom_call.1} parent=1 // pred_check
      _
    $region67: #{tpu_custom_call.1} parent=1 // pred_check_branch
      %3312 = sbr.rel (0) target = $region69
    $region68: #{tpu_custom_call.1} parent=1 // pred_region
      %3314 = dma.done [#allocation4], 256
    $region69: #{tpu_custom_call.1} parent=1 // pred_fallthru
      _
    %3315 = vsyncpa [#allocation3], 1
    %3316 = vsyncpa [#allocation6], 1
    %3317 = vsyncpa [#allocation9], 1
    %3318 = vsyncpa [#allocation12], 1
    %3319 = vsyncpa [#allocation4], 1

</llo_original>
